<compile_context>
chip_gen: v7x
topology: tpu7x:2x2x1
jax: 0.10.0
libtpu: 0.0.40
codegen_flags: <defaults>
</compile_context>

<pallas_src>
import numpy as np
import jax
import jax.numpy as jnp
from jax.experimental import pallas as pl
from jax.experimental.pallas import tpu as pltpu

# ----------------------------- configuration --------------------------------
NUM_CLASSES = 4
BBOX_ATTRS = NUM_CLASSES + 5
ANCHORS = [(4, 6), (7, 9), (10, 12), (12, 16), (16, 20), (20, 28),
           (28, 36), (40, 48), (56, 60)]
ANCHORS_MASK = [[6, 7, 8], [3, 4, 5], [0, 1, 2]]
INPUT_SHAPE = (64, 64)
BALANCE = [0.4, 1.0, 4]
BOX_RATIO = 0.05
OBJ_RATIO = 5 * (INPUT_SHAPE[0] * INPUT_SHAPE[1]) / 416 ** 2
CLS_RATIO = 1 * (NUM_CLASSES / 80)
IGNORE_THRESHOLD = 0.5
EPS = 1e-7
MAX_TGT_PER_IMG = 8      # padded number of GT boxes per image fed to the kernel
TSTRIDE = 6              # floats per padded target entry: x, y, w, h, valid, pad
MAX_TILE_ROWS = 64       # <= 8192 cells per grid step (fits v5e/v6e/v7x VMEM easily)


# ------------------------------ Pallas kernel --------------------------------
def _make_kernel(A, n_cls, tile_rows, in_h, in_w, anchor_ws, anchor_hs):
    """Build the per-(batch, tile) kernel with all static config baked in."""
    HW = float(in_h * in_w)
    Wf = float(in_w)
    TILE = float(tile_rows * 128)
    LOGIT_CAP = float(np.log((1.0 - EPS) / EPS))   # clip(sigmoid(t)) == sigmoid(clamp(t))

    def kernel(pred_ref, ytrue_ref, noobj_ref, tgt_ref, out_ref, acc_ref):
        # pred_ref  : (1, A, tile_rows, 128) raw network outputs
        # ytrue_ref : (1, A, tile_rows, 128) target tensor from get_target
        # noobj_ref : (1, tile_rows, 128) initial no-object mask (0 on padded cells)
        # tgt_ref   : SMEM (bs*MAX_TGT_PER_IMG*TSTRIDE,) padded GT table
        # out_ref   : SMEM (8,) final sums
        # acc_ref   : SMEM (8,) running accumulator across the grid
        b = pl.program_id(0)
        ti = pl.program_id(1)

        @pl.when((b == 0) & (ti == 0))
        def _init():
            for k in range(8):
                acc_ref[k] = 0.0

        # ---------------- decode predictions (dense tiles) -------------------
        tx = pred_ref[0, 0]
        ty = pred_ref[0, 1]
        tw = pred_ref[0, 2]
        th = pred_ref[0, 3]
        tconf = pred_ref[0, 4]

        x = 1.0 / (1.0 + jnp.exp(-tx))
        y = 1.0 / (1.0 + jnp.exp(-ty))

        # grid / anchor constants generated in-kernel (no HBM traffic).
        sub = jax.lax.broadcasted_iota(jnp.int32, (tile_rows, 128), 0).astype(jnp.float32)
        lane = jax.lax.broadcasted_iota(jnp.int32, (tile_rows, 128), 1).astype(jnp.float32)
        idx = ti.astype(jnp.float32) * TILE + sub * 128.0 + lane     # exact in f32
        a_id = jnp.floor((idx + 0.5) / HW)
        rem = idx - a_id * HW
        gy = jnp.floor((rem + 0.5) / Wf)
        gx = rem - gy * Wf
        anchor_w = jnp.where(a_id < 0.5, anchor_ws[0],
                             jnp.where(a_id < 1.5, anchor_ws[1], anchor_ws[2]))
        anchor_h = jnp.where(a_id < 0.5, anchor_hs[0],
                             jnp.where(a_id < 1.5, anchor_hs[1], anchor_hs[2]))

        px = x + gx
        py = y + gy
        pw = jnp.exp(tw) * anchor_w
        ph = jnp.exp(th) * anchor_h

        p_x1 = px - pw * 0.5
        p_x2 = px + pw * 0.5
        p_y1 = py - ph * 0.5
        p_y2 = py + ph * 0.5
        area_p = pw * ph

        # ------- ignore mask: running max IoU vs this image's GT boxes -------
        t_base = b * (MAX_TGT_PER_IMG * TSTRIDE)

        def tgt_body(t, iou_max):
            base = t_base + t * TSTRIDE
            txc = tgt_ref[base + 0]
            tyc = tgt_ref[base + 1]
            twc = tgt_ref[base + 2]
            thc = tgt_ref[base + 3]
            valid = tgt_ref[base + 4]
            a_x1 = txc - twc * 0.5
            a_x2 = txc + twc * 0.5
            a_y1 = tyc - thc * 0.5
            a_y2 = tyc + thc * 0.5
            iw = jnp.maximum(jnp.minimum(a_x2, p_x2) - jnp.maximum(a_x1, p_x1), 0.0)
            ih = jnp.maximum(jnp.minimum(a_y2, p_y2) - jnp.maximum(a_y1, p_y1), 0.0)
            inter = iw * ih
            union = twc * thc + area_p - inter
            iou = inter * pl.reciprocal(union, approx=True)   # only compared vs 0.5
            iou = jnp.where(valid > 0.0, iou, 0.0)
            return jnp.maximum(iou_max, iou)

        iou_max = jax.lax.fori_loop(
            0, MAX_TGT_PER_IMG, tgt_body,
            jnp.zeros((tile_rows, 128), jnp.float32), unroll=True)

        noobj = jnp.where(iou_max > IGNORE_THRESHOLD, 0.0, noobj_ref[0])

        # -------- confidence BCE (from logits) on (noobj | obj) cells --------
        obj = ytrue_ref[0, 4]
        tc = jnp.clip(tconf, -LOGIT_CAP, LOGIT_CAP)
        bce_conf = jnp.maximum(tc, 0.0) - tc * obj + jnp.log(1.0 + jnp.exp(-jnp.abs(tc)))
        conf_mask = jnp.maximum(noobj, obj)            # both are {0,1}
        sum_conf = jnp.sum(jnp.where(conf_mask > 0.5, bce_conf, 0.0))
        n_conf = jnp.sum(conf_mask)

        acc_ref[3] = acc_ref[3] + sum_conf
        acc_ref[4] = acc_ref[4] + n_conf

        # ---------------- GIoU + class BCE only where objects exist ----------
        n_obj_tile = jnp.sum(obj)

        @pl.when(n_obj_tile > 0.0)
        def _obj_losses():
            g_x = ytrue_ref[0, 0]
            g_y = ytrue_ref[0, 1]
            g_w = ytrue_ref[0, 2]
            g_h = ytrue_ref[0, 3]
            g_x1 = g_x - g_w * 0.5
            g_x2 = g_x + g_w * 0.5
            g_y1 = g_y - g_h * 0.5
            g_y2 = g_y + g_h * 0.5
            ixw = jnp.maximum(jnp.minimum(p_x2, g_x2) - jnp.maximum(p_x1, g_x1), 0.0)
            ixh = jnp.maximum(jnp.minimum(p_y2, g_y2) - jnp.maximum(p_y1, g_y1), 0.0)
            inter_a = ixw * ixh
            union_a = area_p + g_w * g_h - inter_a
            iou_pg = inter_a / union_a
            exw = jnp.maximum(jnp.maximum(p_x2, g_x2) - jnp.minimum(p_x1, g_x1), 0.0)
            exh = jnp.maximum(jnp.maximum(p_y2, g_y2) - jnp.minimum(p_y1, g_y1), 0.0)
            enclose = exw * exh
            giou = iou_pg - (enclose - union_a) / enclose
            sum_loc = jnp.sum(jnp.where(obj > 0.5, 1.0 - giou, 0.0))

            # raw (NOT sigmoid) class scores, clipped — matches the torch module.
            pcls = pred_ref[0, 5:A]
            tcls = ytrue_ref[0, 5:A]
            pcls_c = jnp.clip(pcls, EPS, 1.0 - EPS)
            bce_cls = -tcls * jnp.log(pcls_c) - (1.0 - tcls) * jnp.log(1.0 - pcls_c)
            cls_per_cell = jnp.sum(bce_cls, axis=0)
            sum_cls = jnp.sum(jnp.where(obj > 0.5, cls_per_cell, 0.0))

            acc_ref[0] = acc_ref[0] + sum_loc
            acc_ref[1] = acc_ref[1] + n_obj_tile
            acc_ref[2] = acc_ref[2] + sum_cls

        # ---------------------------- write-out -------------------------------
        @pl.when((b == pl.num_programs(0) - 1) & (ti == pl.num_programs(1) - 1))
        def _finalize():
            for k in range(8):
                out_ref[k] = acc_ref[k]

    return kernel


# ------------------------- host-side glue (numpy) -----------------------------
def _iou_xywh_np(box_a, box_b):
    a = np.zeros_like(box_a)
    b = np.zeros_like(box_b)
    a[:, 0] = box_a[:, 0] - box_a[:, 2] / 2
    a[:, 2] = box_a[:, 0] + box_a[:, 2] / 2
    a[:, 1] = box_a[:, 1] - box_a[:, 3] / 2
    a[:, 3] = box_a[:, 1] + box_a[:, 3] / 2
    b[:, 0] = box_b[:, 0] - box_b[:, 2] / 2
    b[:, 2] = box_b[:, 0] + box_b[:, 2] / 2
    b[:, 1] = box_b[:, 1] - box_b[:, 3] / 2
    b[:, 3] = box_b[:, 1] + box_b[:, 3] / 2
    max_xy = np.minimum(a[:, None, 2:4], b[None, :, 2:4])
    min_xy = np.maximum(a[:, None, 0:2], b[None, :, 0:2])
    inter = np.clip(max_xy - min_xy, 0.0, None)
    inter = inter[..., 0] * inter[..., 1]
    area_a = ((a[:, 2] - a[:, 0]) * (a[:, 3] - a[:, 1]))[:, None]
    area_b = ((b[:, 2] - b[:, 0]) * (b[:, 3] - b[:, 1]))[None, :]
    return inter / (area_a + area_b - inter)


# TODO(synk): get_target is a ragged, data-dependent scatter over a handful of
# GT boxes; it is kept as host-side numpy preprocessing (no clean Pallas form).
def _get_target_np(ind, targets, scaled_anchors, in_h, in_w):
    bs = len(targets)
    na = len(ANCHORS_MASK[ind])
    noobj_mask = np.ones((bs, na, in_h, in_w), np.float32)
    y_true = np.zeros((bs, na, in_h, in_w, BBOX_ATTRS), np.float32)
    for b in range(bs):
        tb = np.asarray(targets[b], np.float32)
        if tb.shape[0] == 0:
            continue
        bt = np.zeros_like(tb)
        bt[:, [0, 2]] = tb[:, [0, 2]] * in_w
        bt[:, [1, 3]] = tb[:, [1, 3]] * in_h
        bt[:, 4] = tb[:, 4]
        gt_box = np.concatenate([np.zeros((bt.shape[0], 2), np.float32),
                                 bt[:, 2:4]], axis=1)
        anchor_shapes = np.concatenate([np.zeros((len(scaled_anchors), 2), np.float32),
                                        np.asarray(scaled_anchors, np.float32)], axis=1)
        best_ns = np.argmax(_iou_xywh_np(gt_box, anchor_shapes), axis=1)
        for t, best_n in enumerate(best_ns):
            if int(best_n) not in ANCHORS_MASK[ind]:
                continue
            k = ANCHORS_MASK[ind].index(int(best_n))
            i = int(np.floor(bt[t, 0]))
            j = int(np.floor(bt[t, 1]))
            c = int(bt[t, 4])
            noobj_mask[b, k, j, i] = 0.0
            y_true[b, k, j, i, 0:4] = bt[t, 0:4]
            y_true[b, k, j, i, 4] = 1.0
            y_true[b, k, j, i, 5 + c] = 1.0
    return y_true, noobj_mask


def yolo_loss_forward(ind, inp, targets):
    inp = np.asarray(inp, np.float32)
    bs, ch, in_h, in_w = inp.shape
    A = BBOX_ATTRS
    na = len(ANCHORS_MASK[ind])
    assert ch == na * A

    stride_h = INPUT_SHAPE[0] / in_h
    stride_w = INPUT_SHAPE[1] / in_w
    scaled_anchors = np.array([(aw / stride_w, ah / stride_h) for aw, ah in ANCHORS],
                              np.float32)

    y_true, noobj = _get_target_np(ind, targets, scaled_anchors, in_h, in_w)

    # --- lay cells out as dense (rows, 128) tiles, padded with zeros ---------
    C = na * in_h * in_w                               # cells per image
    rows = -(-C // 128)
    rows8 = ((rows + 7) // 8) * 8
    num_tiles = -(-rows8 // MAX_TILE_ROWS)
    tile_rows = ((-(-rows8 // num_tiles) + 7) // 8) * 8
    r_total = num_tiles * tile_rows
    c_pad = r_total * 128

    pred = inp.reshape(bs, na, A, in_h, in_w).transpose(0, 2, 1, 3, 4).reshape(bs, A, C)
    pred = np.pad(pred, ((0, 0), (0, 0), (0, c_pad - C))).reshape(bs, A, r_total, 128)

    yt = y_true.transpose(0, 4, 1, 2, 3).reshape(bs, A, C)
    yt = np.pad(yt, ((0, 0), (0, 0), (0, c_pad - C))).reshape(bs, A, r_total, 128)

    nb = np.pad(noobj.reshape(bs, C), ((0, 0), (0, c_pad - C))).reshape(bs, r_total, 128)

    # --- padded GT table (SMEM): [x, y, w, h, valid, pad] per slot ------------
    tgt = np.zeros((bs * MAX_TGT_PER_IMG * TSTRIDE,), np.float32)
    for b in range(bs):
        tb = np.asarray(targets[b], np.float32)
        nt = min(tb.shape[0], MAX_TGT_PER_IMG)
        for t in range(nt):
            base = (b * MAX_TGT_PER_IMG + t) * TSTRIDE
            tgt[base + 0] = tb[t, 0] * in_w
            tgt[base + 1] = tb[t, 1] * in_h
            tgt[base + 2] = tb[t, 2] * in_w
            tgt[base + 3] = tb[t, 3] * in_h
            tgt[base + 4] = 1.0

    aw = tuple(float(v) for v in scaled_anchors[ANCHORS_MASK[ind], 0])
    ah = tuple(float(v) for v in scaled_anchors[ANCHORS_MASK[ind], 1])
    kernel = _make_kernel(A, NUM_CLASSES, tile_rows, in_h, in_w, aw, ah)

    out = pl.pallas_call(
        kernel,
        out_shape=jax.ShapeDtypeStruct((8,), jnp.float32),
        grid=(bs, num_tiles),
        in_specs=[
            pl.BlockSpec((1, A, tile_rows, 128), lambda b, t: (b, 0, t, 0)),
            pl.BlockSpec((1, A, tile_rows, 128), lambda b, t: (b, 0, t, 0)),
            pl.BlockSpec((1, tile_rows, 128), lambda b, t: (b, t, 0)),
            pl.BlockSpec(memory_space=pltpu.MemorySpace.SMEM),
        ],
        out_specs=pl.BlockSpec(memory_space=pltpu.MemorySpace.SMEM),
        scratch_shapes=[pltpu.SMEM((8,), jnp.float32)],
        compiler_params=pltpu.CompilerParams(
            dimension_semantics=("arbitrary", "arbitrary")),
    )(jnp.asarray(pred), jnp.asarray(yt), jnp.asarray(nb), jnp.asarray(tgt))

    sum_loc, n_obj = out[0], out[1]
    sum_cls, sum_conf, n_conf = out[2], out[3], out[4]

    loc_cls = (sum_loc / jnp.maximum(n_obj, 1.0)) * BOX_RATIO + \
              (sum_cls / jnp.maximum(n_obj * NUM_CLASSES, 1.0)) * CLS_RATIO
    loss = jnp.where(n_obj > 0, loc_cls, 0.0)
    loss = loss + (sum_conf / jnp.maximum(n_conf, 1.0)) * BALANCE[ind] * OBJ_RATIO
    return loss


# ---------------------------------- main --------------------------------------
if __name__ == "__main__":
    key = jax.random.PRNGKey(0)
    bs, in_h, in_w = 2, 16, 16
    ch = 3 * BBOX_ATTRS
    k1, k2, k3 = jax.random.split(key, 3)

    inp = jax.random.normal(k1, (bs, ch, in_h, in_w), jnp.float32)

    def make_targets(k, n):
        kxy, kwh, kc = jax.random.split(k, 3)
        xy = jax.random.uniform(kxy, (n, 2), minval=0.2, maxval=0.8)
        wh = jax.random.uniform(kwh, (n, 2), minval=0.1, maxval=0.4)
        cls = jax.random.randint(kc, (n, 1), 0, NUM_CLASSES).astype(jnp.float32)
        return np.asarray(jnp.concatenate([xy, wh, cls], axis=1))

    targets = [make_targets(k2, 3), make_targets(k3, 2)]

    ind = 1  # feature level with anchors_mask [3, 4, 5], balance 1.0
    loss = yolo_loss_forward(ind, np.asarray(inp), targets)
    loss = jax.block_until_ready(loss)
    assert np.isfinite(float(loss))
    print("KERNEL_OK")
</pallas_src>

<mosaic_0001>
module attributes {stable_mosaic.version = 11 : i64} {
  func.func @kernel(%arg0: i32, %arg1: i32, %arg2: memref<1x9x8x128xf32, #tpu.memory_space<vmem>>, %arg3: memref<1x9x8x128xf32, #tpu.memory_space<vmem>>, %arg4: memref<1x8x128xf32, #tpu.memory_space<vmem>>, %arg5: memref<96xf32, #tpu.memory_space<smem>>, %arg6: memref<8xf32, #tpu.memory_space<smem>>, %arg7: memref<8xf32, #tpu.memory_space<smem>>) attributes {dimension_semantics = [#tpu.dimension_semantics<arbitrary>, #tpu.dimension_semantics<arbitrary>], iteration_bounds = array<i64: 2, 1>, scalar_prefetch = 0 : i64, scratch_operands = 1 : i64, tpu.core_type = #tpu.core_type<tc>, window_params = [{transform_indices = @transform_0, window_bounds = array<i64: 1, 9, 8, 128>}, {transform_indices = @transform_1, window_bounds = array<i64: 1, 9, 8, 128>}, {transform_indices = @transform_2, window_bounds = array<i64: 1, 8, 128>}, {transform_indices = @transform_3, window_bounds = array<i64: 96>}, {transform_indices = @transform_4, window_bounds = array<i64: 8>}]} {
    %c0_i32 = arith.constant 0 : i32
    %0 = arith.cmpi eq, %arg0, %c0_i32 : i32
    %c0_i32_0 = arith.constant 0 : i32
    %1 = arith.cmpi eq, %arg1, %c0_i32_0 : i32
    %2 = arith.andi %0, %1 : i1
    %3 = arith.extui %2 : i1 to i32
    %c0_i32_1 = arith.constant 0 : i32
    %4 = arith.cmpi ne, %3, %c0_i32_1 : i32
    scf.if %4 {
      %cst_186 = arith.constant 0.000000e+00 : f32
      %c0_187 = arith.constant 0 : index
      %550 = memref.load %arg7[%c0_187] : memref<8xf32, #tpu.memory_space<smem>>
      memref.store %cst_186, %arg7[%c0_187] : memref<8xf32, #tpu.memory_space<smem>>
      %cst_188 = arith.constant 0.000000e+00 : f32
      %c1_189 = arith.constant 1 : index
      %551 = memref.load %arg7[%c1_189] : memref<8xf32, #tpu.memory_space<smem>>
      memref.store %cst_188, %arg7[%c1_189] : memref<8xf32, #tpu.memory_space<smem>>
      %cst_190 = arith.constant 0.000000e+00 : f32
      %c2_191 = arith.constant 2 : index
      %552 = memref.load %arg7[%c2_191] : memref<8xf32, #tpu.memory_space<smem>>
      memref.store %cst_190, %arg7[%c2_191] : memref<8xf32, #tpu.memory_space<smem>>
      %cst_192 = arith.constant 0.000000e+00 : f32
      %c3_193 = arith.constant 3 : index
      %553 = memref.load %arg7[%c3_193] : memref<8xf32, #tpu.memory_space<smem>>
      memref.store %cst_192, %arg7[%c3_193] : memref<8xf32, #tpu.memory_space<smem>>
      %cst_194 = arith.constant 0.000000e+00 : f32
      %c4_195 = arith.constant 4 : index
      %554 = memref.load %arg7[%c4_195] : memref<8xf32, #tpu.memory_space<smem>>
      memref.store %cst_194, %arg7[%c4_195] : memref<8xf32, #tpu.memory_space<smem>>
      %cst_196 = arith.constant 0.000000e+00 : f32
      %c5 = arith.constant 5 : index
      %555 = memref.load %arg7[%c5] : memref<8xf32, #tpu.memory_space<smem>>
      memref.store %cst_196, %arg7[%c5] : memref<8xf32, #tpu.memory_space<smem>>
      %cst_197 = arith.constant 0.000000e+00 : f32
      %c6 = arith.constant 6 : index
      %556 = memref.load %arg7[%c6] : memref<8xf32, #tpu.memory_space<smem>>
      memref.store %cst_197, %arg7[%c6] : memref<8xf32, #tpu.memory_space<smem>>
      %cst_198 = arith.constant 0.000000e+00 : f32
      %c7 = arith.constant 7 : index
      %557 = memref.load %arg7[%c7] : memref<8xf32, #tpu.memory_space<smem>>
      memref.store %cst_198, %arg7[%c7] : memref<8xf32, #tpu.memory_space<smem>>
    } else {
    }
    %c0 = arith.constant 0 : index
    %c0_2 = arith.constant 0 : index
    %c0_3 = arith.constant 0 : index
    %c0_4 = arith.constant 0 : index
    %5 = vector.load %arg2[%c0, %c0_2, %c0_3, %c0_4] : memref<1x9x8x128xf32, #tpu.memory_space<vmem>>, vector<1x1x8x128xf32>
    %6 = vector.shape_cast %5 : vector<1x1x8x128xf32> to vector<8x128xf32>
    %c0_5 = arith.constant 0 : index
    %c1 = arith.constant 1 : index
    %c0_6 = arith.constant 0 : index
    %c0_7 = arith.constant 0 : index
    %7 = vector.load %arg2[%c0_5, %c1, %c0_6, %c0_7] : memref<1x9x8x128xf32, #tpu.memory_space<vmem>>, vector<1x1x8x128xf32>
    %8 = vector.shape_cast %7 : vector<1x1x8x128xf32> to vector<8x128xf32>
    %c0_8 = arith.constant 0 : index
    %c2 = arith.constant 2 : index
    %c0_9 = arith.constant 0 : index
    %c0_10 = arith.constant 0 : index
    %9 = vector.load %arg2[%c0_8, %c2, %c0_9, %c0_10] : memref<1x9x8x128xf32, #tpu.memory_space<vmem>>, vector<1x1x8x128xf32>
    %10 = vector.shape_cast %9 : vector<1x1x8x128xf32> to vector<8x128xf32>
    %c0_11 = arith.constant 0 : index
    %c3 = arith.constant 3 : index
    %c0_12 = arith.constant 0 : index
    %c0_13 = arith.constant 0 : index
    %11 = vector.load %arg2[%c0_11, %c3, %c0_12, %c0_13] : memref<1x9x8x128xf32, #tpu.memory_space<vmem>>, vector<1x1x8x128xf32>
    %12 = vector.shape_cast %11 : vector<1x1x8x128xf32> to vector<8x128xf32>
    %c0_14 = arith.constant 0 : index
    %c4 = arith.constant 4 : index
    %c0_15 = arith.constant 0 : index
    %c0_16 = arith.constant 0 : index
    %13 = vector.load %arg2[%c0_14, %c4, %c0_15, %c0_16] : memref<1x9x8x128xf32, #tpu.memory_space<vmem>>, vector<1x1x8x128xf32>
    %14 = vector.shape_cast %13 : vector<1x1x8x128xf32> to vector<8x128xf32>
    %cst = arith.constant 0.000000e+00 : f32
    %15 = vector.broadcast %cst : f32 to vector<8x128xf32>
    %16 = arith.subf %15, %6 : vector<8x128xf32>
    %17 = math.exp %16 : vector<8x128xf32>
    %cst_17 = arith.constant 1.000000e+00 : f32
    %18 = vector.broadcast %cst_17 : f32 to vector<8x128xf32>
    %19 = arith.addf %18, %17 : vector<8x128xf32>
    %cst_18 = arith.constant 1.000000e+00 : f32
    %20 = vector.broadcast %cst_18 : f32 to vector<8x128xf32>
    %21 = arith.divf %20, %19 : vector<8x128xf32>
    %cst_19 = arith.constant 0.000000e+00 : f32
    %22 = vector.broadcast %cst_19 : f32 to vector<8x128xf32>
    %23 = arith.subf %22, %8 : vector<8x128xf32>
    %24 = math.exp %23 : vector<8x128xf32>
    %cst_20 = arith.constant 1.000000e+00 : f32
    %25 = vector.broadcast %cst_20 : f32 to vector<8x128xf32>
    %26 = arith.addf %25, %24 : vector<8x128xf32>
    %cst_21 = arith.constant 1.000000e+00 : f32
    %27 = vector.broadcast %cst_21 : f32 to vector<8x128xf32>
    %28 = arith.divf %27, %26 : vector<8x128xf32>
    %29 = tpu.iota {dimensions = array<i32: 0>} : vector<8x128xi32>
    %30 = arith.sitofp %29 : vector<8x128xi32> to vector<8x128xf32>
    %31 = tpu.iota {dimensions = array<i32: 1>} : vector<8x128xi32>
    %32 = arith.sitofp %31 : vector<8x128xi32> to vector<8x128xf32>
    %33 = arith.sitofp %arg1 : i32 to f32
    %cst_22 = arith.constant 1.024000e+03 : f32
    %34 = arith.mulf %33, %cst_22 : f32
    %cst_23 = arith.constant 1.280000e+02 : f32
    %35 = vector.broadcast %cst_23 : f32 to vector<8x128xf32>
    %36 = arith.mulf %30, %35 : vector<8x128xf32>
    %37 = vector.broadcast %34 : f32 to vector<8x128xf32>
    %38 = arith.addf %37, %36 : vector<8x128xf32>
    %39 = arith.addf %38, %32 : vector<8x128xf32>
    %cst_24 = arith.constant 5.000000e-01 : f32
    %40 = vector.broadcast %cst_24 : f32 to vector<8x128xf32>
    %41 = arith.addf %39, %40 : vector<8x128xf32>
    %cst_25 = arith.constant 2.560000e+02 : f32
    %42 = vector.broadcast %cst_25 : f32 to vector<8x128xf32>
    %43 = arith.divf %41, %42 : vector<8x128xf32>
    %44 = math.floor %43 : vector<8x128xf32>
    %cst_26 = arith.constant 2.560000e+02 : f32
    %45 = vector.broadcast %cst_26 : f32 to vector<8x128xf32>
    %46 = arith.mulf %44, %45 : vector<8x128xf32>
    %47 = arith.subf %39, %46 : vector<8x128xf32>
    %cst_27 = arith.constant 5.000000e-01 : f32
    %48 = vector.broadcast %cst_27 : f32 to vector<8x128xf32>
    %49 = arith.addf %47, %48 : vector<8x128xf32>
    %cst_28 = arith.constant 1.600000e+01 : f32
    %50 = vector.broadcast %cst_28 : f32 to vector<8x128xf32>
    %51 = arith.divf %49, %50 : vector<8x128xf32>
    %52 = math.floor %51 : vector<8x128xf32>
    %cst_29 = arith.constant 1.600000e+01 : f32
    %53 = vector.broadcast %cst_29 : f32 to vector<8x128xf32>
    %54 = arith.mulf %52, %53 : vector<8x128xf32>
    %55 = arith.subf %47, %54 : vector<8x128xf32>
    %cst_30 = arith.constant 5.000000e-01 : f32
    %56 = vector.broadcast %cst_30 : f32 to vector<8x128xf32>
    %57 = arith.cmpf olt, %44, %56 : vector<8x128xf32>
    %cst_31 = arith.constant 1.500000e+00 : f32
    %58 = vector.broadcast %cst_31 : f32 to vector<8x128xf32>
    %59 = arith.cmpf olt, %44, %58 : vector<8x128xf32>
    %cst_32 = arith.constant 4.000000e+00 : f32
    %cst_33 = arith.constant 5.000000e+00 : f32
    %60 = vector.broadcast %cst_32 : f32 to vector<8x128xf32>
    %61 = vector.broadcast %cst_33 : f32 to vector<8x128xf32>
    %62 = arith.select %59, %60, %61 : vector<8x128xi1>, vector<8x128xf32>
    %cst_34 = arith.constant 3.000000e+00 : f32
    %63 = vector.broadcast %cst_34 : f32 to vector<8x128xf32>
    %64 = arith.select %57, %63, %62 : vector<8x128xi1>, vector<8x128xf32>
    %cst_35 = arith.constant 5.000000e-01 : f32
    %65 = vector.broadcast %cst_35 : f32 to vector<8x128xf32>
    %66 = arith.cmpf olt, %44, %65 : vector<8x128xf32>
    %cst_36 = arith.constant 1.500000e+00 : f32
    %67 = vector.broadcast %cst_36 : f32 to vector<8x128xf32>
    %68 = arith.cmpf olt, %44, %67 : vector<8x128xf32>
    %cst_37 = arith.constant 5.000000e+00 : f32
    %cst_38 = arith.constant 7.000000e+00 : f32
    %69 = vector.broadcast %cst_37 : f32 to vector<8x128xf32>
    %70 = vector.broadcast %cst_38 : f32 to vector<8x128xf32>
    %71 = arith.select %68, %69, %70 : vector<8x128xi1>, vector<8x128xf32>
    %cst_39 = arith.constant 4.000000e+00 : f32
    %72 = vector.broadcast %cst_39 : f32 to vector<8x128xf32>
    %73 = arith.select %66, %72, %71 : vector<8x128xi1>, vector<8x128xf32>
    %74 = arith.addf %21, %55 : vector<8x128xf32>
    %75 = arith.addf %28, %52 : vector<8x128xf32>
    %76 = math.exp %10 : vector<8x128xf32>
    %77 = arith.mulf %76, %64 : vector<8x128xf32>
    %78 = math.exp %12 : vector<8x128xf32>
    %79 = arith.mulf %78, %73 : vector<8x128xf32>
    %cst_40 = arith.constant 5.000000e-01 : f32
    %80 = vector.broadcast %cst_40 : f32 to vector<8x128xf32>
    %81 = arith.mulf %77, %80 : vector<8x128xf32>
    %82 = arith.subf %74, %81 : vector<8x128xf32>
    %cst_41 = arith.constant 5.000000e-01 : f32
    %83 = vector.broadcast %cst_41 : f32 to vector<8x128xf32>
    %84 = arith.mulf %77, %83 : vector<8x128xf32>
    %85 = arith.addf %74, %84 : vector<8x128xf32>
    %cst_42 = arith.constant 5.000000e-01 : f32
    %86 = vector.broadcast %cst_42 : f32 to vector<8x128xf32>
    %87 = arith.mulf %79, %86 : vector<8x128xf32>
    %88 = arith.subf %75, %87 : vector<8x128xf32>
    %cst_43 = arith.constant 5.000000e-01 : f32
    %89 = vector.broadcast %cst_43 : f32 to vector<8x128xf32>
    %90 = arith.mulf %79, %89 : vector<8x128xf32>
    %91 = arith.addf %75, %90 : vector<8x128xf32>
    %92 = arith.mulf %77, %79 : vector<8x128xf32>
    %c48_i32 = arith.constant 48 : i32
    %93 = arith.muli %arg0, %c48_i32 : i32
    %cst_44 = arith.constant 0.000000e+00 : f32
    %94 = vector.broadcast %cst_44 : f32 to vector<8x128xf32>
    %c0_i32_45 = arith.constant 0 : i32
    %c6_i32 = arith.constant 6 : i32
    %95 = arith.muli %c0_i32_45, %c6_i32 : i32
    %96 = arith.addi %93, %95 : i32
    %c0_i32_46 = arith.constant 0 : i32
    %97 = arith.addi %96, %c0_i32_46 : i32
    %98 = arith.index_cast %97 : i32 to index
    %99 = memref.load %arg5[%98] : memref<96xf32, #tpu.memory_space<smem>>
    %c1_i32 = arith.constant 1 : i32
    %100 = arith.addi %96, %c1_i32 : i32
    %101 = arith.index_cast %100 : i32 to index
    %102 = memref.load %arg5[%101] : memref<96xf32, #tpu.memory_space<smem>>
    %c2_i32 = arith.constant 2 : i32
    %103 = arith.addi %96, %c2_i32 : i32
    %104 = arith.index_cast %103 : i32 to index
    %105 = memref.load %arg5[%104] : memref<96xf32, #tpu.memory_space<smem>>
    %c3_i32 = arith.constant 3 : i32
    %106 = arith.addi %96, %c3_i32 : i32
    %107 = arith.index_cast %106 : i32 to index
    %108 = memref.load %arg5[%107] : memref<96xf32, #tpu.memory_space<smem>>
    %c4_i32 = arith.constant 4 : i32
    %109 = arith.addi %96, %c4_i32 : i32
    %110 = arith.index_cast %109 : i32 to index
    %111 = memref.load %arg5[%110] : memref<96xf32, #tpu.memory_space<smem>>
    %cst_47 = arith.constant 5.000000e-01 : f32
    %112 = arith.mulf %105, %cst_47 : f32
    %113 = arith.subf %99, %112 : f32
    %cst_48 = arith.constant 5.000000e-01 : f32
    %114 = arith.mulf %105, %cst_48 : f32
    %115 = arith.addf %99, %114 : f32
    %cst_49 = arith.constant 5.000000e-01 : f32
    %116 = arith.mulf %108, %cst_49 : f32
    %117 = arith.subf %102, %116 : f32
    %cst_50 = arith.constant 5.000000e-01 : f32
    %118 = arith.mulf %108, %cst_50 : f32
    %119 = arith.addf %102, %118 : f32
    %120 = vector.broadcast %115 : f32 to vector<8x128xf32>
    %121 = arith.minimumf %120, %85 : vector<8x128xf32>
    %122 = vector.broadcast %113 : f32 to vector<8x128xf32>
    %123 = arith.maximumf %122, %82 : vector<8x128xf32>
    %124 = arith.subf %121, %123 : vector<8x128xf32>
    %cst_51 = arith.constant 0.000000e+00 : f32
    %125 = vector.broadcast %cst_51 : f32 to vector<8x128xf32>
    %126 = arith.maximumf %124, %125 : vector<8x128xf32>
    %127 = vector.broadcast %119 : f32 to vector<8x128xf32>
    %128 = arith.minimumf %127, %91 : vector<8x128xf32>
    %129 = vector.broadcast %117 : f32 to vector<8x128xf32>
    %130 = arith.maximumf %129, %88 : vector<8x128xf32>
    %131 = arith.subf %128, %130 : vector<8x128xf32>
    %cst_52 = arith.constant 0.000000e+00 : f32
    %132 = vector.broadcast %cst_52 : f32 to vector<8x128xf32>
    %133 = arith.maximumf %131, %132 : vector<8x128xf32>
    %134 = arith.mulf %126, %133 : vector<8x128xf32>
    %135 = arith.mulf %105, %108 : f32
    %136 = vector.broadcast %135 : f32 to vector<8x128xf32>
    %137 = arith.addf %136, %92 : vector<8x128xf32>
    %138 = arith.subf %137, %134 : vector<8x128xf32>
    %139 = tpu.reciprocal %138 {approx = true} : vector<8x128xf32> -> vector<8x128xf32>
    %140 = arith.mulf %134, %139 : vector<8x128xf32>
    %cst_53 = arith.constant 0.000000e+00 : f32
    %141 = arith.cmpf ogt, %111, %cst_53 : f32
    %cst_54 = arith.constant 0.000000e+00 : f32
    %142 = vector.broadcast %cst_54 : f32 to vector<8x128xf32>
    %143 = arith.select %141, %140, %142 : vector<8x128xf32>
    %144 = arith.maximumf %94, %143 : vector<8x128xf32>
    %c1_i32_55 = arith.constant 1 : i32
    %c6_i32_56 = arith.constant 6 : i32
    %145 = arith.muli %c1_i32_55, %c6_i32_56 : i32
    %146 = arith.addi %93, %145 : i32
    %c0_i32_57 = arith.constant 0 : i32
    %147 = arith.addi %146, %c0_i32_57 : i32
    %148 = arith.index_cast %147 : i32 to index
    %149 = memref.load %arg5[%148] : memref<96xf32, #tpu.memory_space<smem>>
    %c1_i32_58 = arith.constant 1 : i32
    %150 = arith.addi %146, %c1_i32_58 : i32
    %151 = arith.index_cast %150 : i32 to index
    %152 = memref.load %arg5[%151] : memref<96xf32, #tpu.memory_space<smem>>
    %c2_i32_59 = arith.constant 2 : i32
    %153 = arith.addi %146, %c2_i32_59 : i32
    %154 = arith.index_cast %153 : i32 to index
    %155 = memref.load %arg5[%154] : memref<96xf32, #tpu.memory_space<smem>>
    %c3_i32_60 = arith.constant 3 : i32
    %156 = arith.addi %146, %c3_i32_60 : i32
    %157 = arith.index_cast %156 : i32 to index
    %158 = memref.load %arg5[%157] : memref<96xf32, #tpu.memory_space<smem>>
    %c4_i32_61 = arith.constant 4 : i32
    %159 = arith.addi %146, %c4_i32_61 : i32
    %160 = arith.index_cast %159 : i32 to index
    %161 = memref.load %arg5[%160] : memref<96xf32, #tpu.memory_space<smem>>
    %cst_62 = arith.constant 5.000000e-01 : f32
    %162 = arith.mulf %155, %cst_62 : f32
    %163 = arith.subf %149, %162 : f32
    %cst_63 = arith.constant 5.000000e-01 : f32
    %164 = arith.mulf %155, %cst_63 : f32
    %165 = arith.addf %149, %164 : f32
    %cst_64 = arith.constant 5.000000e-01 : f32
    %166 = arith.mulf %158, %cst_64 : f32
    %167 = arith.subf %152, %166 : f32
    %cst_65 = arith.constant 5.000000e-01 : f32
    %168 = arith.mulf %158, %cst_65 : f32
    %169 = arith.addf %152, %168 : f32
    %170 = vector.broadcast %165 : f32 to vector<8x128xf32>
    %171 = arith.minimumf %170, %85 : vector<8x128xf32>
    %172 = vector.broadcast %163 : f32 to vector<8x128xf32>
    %173 = arith.maximumf %172, %82 : vector<8x128xf32>
    %174 = arith.subf %171, %173 : vector<8x128xf32>
    %cst_66 = arith.constant 0.000000e+00 : f32
    %175 = vector.broadcast %cst_66 : f32 to vector<8x128xf32>
    %176 = arith.maximumf %174, %175 : vector<8x128xf32>
    %177 = vector.broadcast %169 : f32 to vector<8x128xf32>
    %178 = arith.minimumf %177, %91 : vector<8x128xf32>
    %179 = vector.broadcast %167 : f32 to vector<8x128xf32>
    %180 = arith.maximumf %179, %88 : vector<8x128xf32>
    %181 = arith.subf %178, %180 : vector<8x128xf32>
    %cst_67 = arith.constant 0.000000e+00 : f32
    %182 = vector.broadcast %cst_67 : f32 to vector<8x128xf32>
    %183 = arith.maximumf %181, %182 : vector<8x128xf32>
    %184 = arith.mulf %176, %183 : vector<8x128xf32>
    %185 = arith.mulf %155, %158 : f32
    %186 = vector.broadcast %185 : f32 to vector<8x128xf32>
    %187 = arith.addf %186, %92 : vector<8x128xf32>
    %188 = arith.subf %187, %184 : vector<8x128xf32>
    %189 = tpu.reciprocal %188 {approx = true} : vector<8x128xf32> -> vector<8x128xf32>
    %190 = arith.mulf %184, %189 : vector<8x128xf32>
    %cst_68 = arith.constant 0.000000e+00 : f32
    %191 = arith.cmpf ogt, %161, %cst_68 : f32
    %cst_69 = arith.constant 0.000000e+00 : f32
    %192 = vector.broadcast %cst_69 : f32 to vector<8x128xf32>
    %193 = arith.select %191, %190, %192 : vector<8x128xf32>
    %194 = arith.maximumf %144, %193 : vector<8x128xf32>
    %c2_i32_70 = arith.constant 2 : i32
    %c6_i32_71 = arith.constant 6 : i32
    %195 = arith.muli %c2_i32_70, %c6_i32_71 : i32
    %196 = arith.addi %93, %195 : i32
    %c0_i32_72 = arith.constant 0 : i32
    %197 = arith.addi %196, %c0_i32_72 : i32
    %198 = arith.index_cast %197 : i32 to index
    %199 = memref.load %arg5[%198] : memref<96xf32, #tpu.memory_space<smem>>
    %c1_i32_73 = arith.constant 1 : i32
    %200 = arith.addi %196, %c1_i32_73 : i32
    %201 = arith.index_cast %200 : i32 to index
    %202 = memref.load %arg5[%201] : memref<96xf32, #tpu.memory_space<smem>>
    %c2_i32_74 = arith.constant 2 : i32
    %203 = arith.addi %196, %c2_i32_74 : i32
    %204 = arith.index_cast %203 : i32 to index
    %205 = memref.load %arg5[%204] : memref<96xf32, #tpu.memory_space<smem>>
    %c3_i32_75 = arith.constant 3 : i32
    %206 = arith.addi %196, %c3_i32_75 : i32
    %207 = arith.index_cast %206 : i32 to index
    %208 = memref.load %arg5[%207] : memref<96xf32, #tpu.memory_space<smem>>
    %c4_i32_76 = arith.constant 4 : i32
    %209 = arith.addi %196, %c4_i32_76 : i32
    %210 = arith.index_cast %209 : i32 to index
    %211 = memref.load %arg5[%210] : memref<96xf32, #tpu.memory_space<smem>>
    %cst_77 = arith.constant 5.000000e-01 : f32
    %212 = arith.mulf %205, %cst_77 : f32
    %213 = arith.subf %199, %212 : f32
    %cst_78 = arith.constant 5.000000e-01 : f32
    %214 = arith.mulf %205, %cst_78 : f32
    %215 = arith.addf %199, %214 : f32
    %cst_79 = arith.constant 5.000000e-01 : f32
    %216 = arith.mulf %208, %cst_79 : f32
    %217 = arith.subf %202, %216 : f32
    %cst_80 = arith.constant 5.000000e-01 : f32
    %218 = arith.mulf %208, %cst_80 : f32
    %219 = arith.addf %202, %218 : f32
    %220 = vector.broadcast %215 : f32 to vector<8x128xf32>
    %221 = arith.minimumf %220, %85 : vector<8x128xf32>
    %222 = vector.broadcast %213 : f32 to vector<8x128xf32>
    %223 = arith.maximumf %222, %82 : vector<8x128xf32>
    %224 = arith.subf %221, %223 : vector<8x128xf32>
    %cst_81 = arith.constant 0.000000e+00 : f32
    %225 = vector.broadcast %cst_81 : f32 to vector<8x128xf32>
    %226 = arith.maximumf %224, %225 : vector<8x128xf32>
    %227 = vector.broadcast %219 : f32 to vector<8x128xf32>
    %228 = arith.minimumf %227, %91 : vector<8x128xf32>
    %229 = vector.broadcast %217 : f32 to vector<8x128xf32>
    %230 = arith.maximumf %229, %88 : vector<8x128xf32>
    %231 = arith.subf %228, %230 : vector<8x128xf32>
    %cst_82 = arith.constant 0.000000e+00 : f32
    %232 = vector.broadcast %cst_82 : f32 to vector<8x128xf32>
    %233 = arith.maximumf %231, %232 : vector<8x128xf32>
    %234 = arith.mulf %226, %233 : vector<8x128xf32>
    %235 = arith.mulf %205, %208 : f32
    %236 = vector.broadcast %235 : f32 to vector<8x128xf32>
    %237 = arith.addf %236, %92 : vector<8x128xf32>
    %238 = arith.subf %237, %234 : vector<8x128xf32>
    %239 = tpu.reciprocal %238 {approx = true} : vector<8x128xf32> -> vector<8x128xf32>
    %240 = arith.mulf %234, %239 : vector<8x128xf32>
    %cst_83 = arith.constant 0.000000e+00 : f32
    %241 = arith.cmpf ogt, %211, %cst_83 : f32
    %cst_84 = arith.constant 0.000000e+00 : f32
    %242 = vector.broadcast %cst_84 : f32 to vector<8x128xf32>
    %243 = arith.select %241, %240, %242 : vector<8x128xf32>
    %244 = arith.maximumf %194, %243 : vector<8x128xf32>
    %c3_i32_85 = arith.constant 3 : i32
    %c6_i32_86 = arith.constant 6 : i32
    %245 = arith.muli %c3_i32_85, %c6_i32_86 : i32
    %246 = arith.addi %93, %245 : i32
    %c0_i32_87 = arith.constant 0 : i32
    %247 = arith.addi %246, %c0_i32_87 : i32
    %248 = arith.index_cast %247 : i32 to index
    %249 = memref.load %arg5[%248] : memref<96xf32, #tpu.memory_space<smem>>
    %c1_i32_88 = arith.constant 1 : i32
    %250 = arith.addi %246, %c1_i32_88 : i32
    %251 = arith.index_cast %250 : i32 to index
    %252 = memref.load %arg5[%251] : memref<96xf32, #tpu.memory_space<smem>>
    %c2_i32_89 = arith.constant 2 : i32
    %253 = arith.addi %246, %c2_i32_89 : i32
    %254 = arith.index_cast %253 : i32 to index
    %255 = memref.load %arg5[%254] : memref<96xf32, #tpu.memory_space<smem>>
    %c3_i32_90 = arith.constant 3 : i32
    %256 = arith.addi %246, %c3_i32_90 : i32
    %257 = arith.index_cast %256 : i32 to index
    %258 = memref.load %arg5[%257] : memref<96xf32, #tpu.memory_space<smem>>
    %c4_i32_91 = arith.constant 4 : i32
    %259 = arith.addi %246, %c4_i32_91 : i32
    %260 = arith.index_cast %259 : i32 to index
    %261 = memref.load %arg5[%260] : memref<96xf32, #tpu.memory_space<smem>>
    %cst_92 = arith.constant 5.000000e-01 : f32
    %262 = arith.mulf %255, %cst_92 : f32
    %263 = arith.subf %249, %262 : f32
    %cst_93 = arith.constant 5.000000e-01 : f32
    %264 = arith.mulf %255, %cst_93 : f32
    %265 = arith.addf %249, %264 : f32
    %cst_94 = arith.constant 5.000000e-01 : f32
    %266 = arith.mulf %258, %cst_94 : f32
    %267 = arith.subf %252, %266 : f32
    %cst_95 = arith.constant 5.000000e-01 : f32
    %268 = arith.mulf %258, %cst_95 : f32
    %269 = arith.addf %252, %268 : f32
    %270 = vector.broadcast %265 : f32 to vector<8x128xf32>
    %271 = arith.minimumf %270, %85 : vector<8x128xf32>
    %272 = vector.broadcast %263 : f32 to vector<8x128xf32>
    %273 = arith.maximumf %272, %82 : vector<8x128xf32>
    %274 = arith.subf %271, %273 : vector<8x128xf32>
    %cst_96 = arith.constant 0.000000e+00 : f32
    %275 = vector.broadcast %cst_96 : f32 to vector<8x128xf32>
    %276 = arith.maximumf %274, %275 : vector<8x128xf32>
    %277 = vector.broadcast %269 : f32 to vector<8x128xf32>
    %278 = arith.minimumf %277, %91 : vector<8x128xf32>
    %279 = vector.broadcast %267 : f32 to vector<8x128xf32>
    %280 = arith.maximumf %279, %88 : vector<8x128xf32>
    %281 = arith.subf %278, %280 : vector<8x128xf32>
    %cst_97 = arith.constant 0.000000e+00 : f32
    %282 = vector.broadcast %cst_97 : f32 to vector<8x128xf32>
    %283 = arith.maximumf %281, %282 : vector<8x128xf32>
    %284 = arith.mulf %276, %283 : vector<8x128xf32>
    %285 = arith.mulf %255, %258 : f32
    %286 = vector.broadcast %285 : f32 to vector<8x128xf32>
    %287 = arith.addf %286, %92 : vector<8x128xf32>
    %288 = arith.subf %287, %284 : vector<8x128xf32>
    %289 = tpu.reciprocal %288 {approx = true} : vector<8x128xf32> -> vector<8x128xf32>
    %290 = arith.mulf %284, %289 : vector<8x128xf32>
    %cst_98 = arith.constant 0.000000e+00 : f32
    %291 = arith.cmpf ogt, %261, %cst_98 : f32
    %cst_99 = arith.constant 0.000000e+00 : f32
    %292 = vector.broadcast %cst_99 : f32 to vector<8x128xf32>
    %293 = arith.select %291, %290, %292 : vector<8x128xf32>
    %294 = arith.maximumf %244, %293 : vector<8x128xf32>
    %c4_i32_100 = arith.constant 4 : i32
    %c6_i32_101 = arith.constant 6 : i32
    %295 = arith.muli %c4_i32_100, %c6_i32_101 : i32
    %296 = arith.addi %93, %295 : i32
    %c0_i32_102 = arith.constant 0 : i32
    %297 = arith.addi %296, %c0_i32_102 : i32
    %298 = arith.index_cast %297 : i32 to index
    %299 = memref.load %arg5[%298] : memref<96xf32, #tpu.memory_space<smem>>
    %c1_i32_103 = arith.constant 1 : i32
    %300 = arith.addi %296, %c1_i32_103 : i32
    %301 = arith.index_cast %300 : i32 to index
    %302 = memref.load %arg5[%301] : memref<96xf32, #tpu.memory_space<smem>>
    %c2_i32_104 = arith.constant 2 : i32
    %303 = arith.addi %296, %c2_i32_104 : i32
    %304 = arith.index_cast %303 : i32 to index
    %305 = memref.load %arg5[%304] : memref<96xf32, #tpu.memory_space<smem>>
    %c3_i32_105 = arith.constant 3 : i32
    %306 = arith.addi %296, %c3_i32_105 : i32
    %307 = arith.index_cast %306 : i32 to index
    %308 = memref.load %arg5[%307] : memref<96xf32, #tpu.memory_space<smem>>
    %c4_i32_106 = arith.constant 4 : i32
    %309 = arith.addi %296, %c4_i32_106 : i32
    %310 = arith.index_cast %309 : i32 to index
    %311 = memref.load %arg5[%310] : memref<96xf32, #tpu.memory_space<smem>>
    %cst_107 = arith.constant 5.000000e-01 : f32
    %312 = arith.mulf %305, %cst_107 : f32
    %313 = arith.subf %299, %312 : f32
    %cst_108 = arith.constant 5.000000e-01 : f32
    %314 = arith.mulf %305, %cst_108 : f32
    %315 = arith.addf %299, %314 : f32
    %cst_109 = arith.constant 5.000000e-01 : f32
    %316 = arith.mulf %308, %cst_109 : f32
    %317 = arith.subf %302, %316 : f32
    %cst_110 = arith.constant 5.000000e-01 : f32
    %318 = arith.mulf %308, %cst_110 : f32
    %319 = arith.addf %302, %318 : f32
    %320 = vector.broadcast %315 : f32 to vector<8x128xf32>
    %321 = arith.minimumf %320, %85 : vector<8x128xf32>
    %322 = vector.broadcast %313 : f32 to vector<8x128xf32>
    %323 = arith.maximumf %322, %82 : vector<8x128xf32>
    %324 = arith.subf %321, %323 : vector<8x128xf32>
    %cst_111 = arith.constant 0.000000e+00 : f32
    %325 = vector.broadcast %cst_111 : f32 to vector<8x128xf32>
    %326 = arith.maximumf %324, %325 : vector<8x128xf32>
    %327 = vector.broadcast %319 : f32 to vector<8x128xf32>
    %328 = arith.minimumf %327, %91 : vector<8x128xf32>
    %329 = vector.broadcast %317 : f32 to vector<8x128xf32>
    %330 = arith.maximumf %329, %88 : vector<8x128xf32>
    %331 = arith.subf %328, %330 : vector<8x128xf32>
    %cst_112 = arith.constant 0.000000e+00 : f32
    %332 = vector.broadcast %cst_112 : f32 to vector<8x128xf32>
    %333 = arith.maximumf %331, %332 : vector<8x128xf32>
    %334 = arith.mulf %326, %333 : vector<8x128xf32>
    %335 = arith.mulf %305, %308 : f32
    %336 = vector.broadcast %335 : f32 to vector<8x128xf32>
    %337 = arith.addf %336, %92 : vector<8x128xf32>
    %338 = arith.subf %337, %334 : vector<8x128xf32>
    %339 = tpu.reciprocal %338 {approx = true} : vector<8x128xf32> -> vector<8x128xf32>
    %340 = arith.mulf %334, %339 : vector<8x128xf32>
    %cst_113 = arith.constant 0.000000e+00 : f32
    %341 = arith.cmpf ogt, %311, %cst_113 : f32
    %cst_114 = arith.constant 0.000000e+00 : f32
    %342 = vector.broadcast %cst_114 : f32 to vector<8x128xf32>
    %343 = arith.select %341, %340, %342 : vector<8x128xf32>
    %344 = arith.maximumf %294, %343 : vector<8x128xf32>
    %c5_i32 = arith.constant 5 : i32
    %c6_i32_115 = arith.constant 6 : i32
    %345 = arith.muli %c5_i32, %c6_i32_115 : i32
    %346 = arith.addi %93, %345 : i32
    %c0_i32_116 = arith.constant 0 : i32
    %347 = arith.addi %346, %c0_i32_116 : i32
    %348 = arith.index_cast %347 : i32 to index
    %349 = memref.load %arg5[%348] : memref<96xf32, #tpu.memory_space<smem>>
    %c1_i32_117 = arith.constant 1 : i32
    %350 = arith.addi %346, %c1_i32_117 : i32
    %351 = arith.index_cast %350 : i32 to index
    %352 = memref.load %arg5[%351] : memref<96xf32, #tpu.memory_space<smem>>
    %c2_i32_118 = arith.constant 2 : i32
    %353 = arith.addi %346, %c2_i32_118 : i32
    %354 = arith.index_cast %353 : i32 to index
    %355 = memref.load %arg5[%354] : memref<96xf32, #tpu.memory_space<smem>>
    %c3_i32_119 = arith.constant 3 : i32
    %356 = arith.addi %346, %c3_i32_119 : i32
    %357 = arith.index_cast %356 : i32 to index
    %358 = memref.load %arg5[%357] : memref<96xf32, #tpu.memory_space<smem>>
    %c4_i32_120 = arith.constant 4 : i32
    %359 = arith.addi %346, %c4_i32_120 : i32
    %360 = arith.index_cast %359 : i32 to index
    %361 = memref.load %arg5[%360] : memref<96xf32, #tpu.memory_space<smem>>
    %cst_121 = arith.constant 5.000000e-01 : f32
    %362 = arith.mulf %355, %cst_121 : f32
    %363 = arith.subf %349, %362 : f32
    %cst_122 = arith.constant 5.000000e-01 : f32
    %364 = arith.mulf %355, %cst_122 : f32
    %365 = arith.addf %349, %364 : f32
    %cst_123 = arith.constant 5.000000e-01 : f32
    %366 = arith.mulf %358, %cst_123 : f32
    %367 = arith.subf %352, %366 : f32
    %cst_124 = arith.constant 5.000000e-01 : f32
    %368 = arith.mulf %358, %cst_124 : f32
    %369 = arith.addf %352, %368 : f32
    %370 = vector.broadcast %365 : f32 to vector<8x128xf32>
    %371 = arith.minimumf %370, %85 : vector<8x128xf32>
    %372 = vector.broadcast %363 : f32 to vector<8x128xf32>
    %373 = arith.maximumf %372, %82 : vector<8x128xf32>
    %374 = arith.subf %371, %373 : vector<8x128xf32>
    %cst_125 = arith.constant 0.000000e+00 : f32
    %375 = vector.broadcast %cst_125 : f32 to vector<8x128xf32>
    %376 = arith.maximumf %374, %375 : vector<8x128xf32>
    %377 = vector.broadcast %369 : f32 to vector<8x128xf32>
    %378 = arith.minimumf %377, %91 : vector<8x128xf32>
    %379 = vector.broadcast %367 : f32 to vector<8x128xf32>
    %380 = arith.maximumf %379, %88 : vector<8x128xf32>
    %381 = arith.subf %378, %380 : vector<8x128xf32>
    %cst_126 = arith.constant 0.000000e+00 : f32
    %382 = vector.broadcast %cst_126 : f32 to vector<8x128xf32>
    %383 = arith.maximumf %381, %382 : vector<8x128xf32>
    %384 = arith.mulf %376, %383 : vector<8x128xf32>
    %385 = arith.mulf %355, %358 : f32
    %386 = vector.broadcast %385 : f32 to vector<8x128xf32>
    %387 = arith.addf %386, %92 : vector<8x128xf32>
    %388 = arith.subf %387, %384 : vector<8x128xf32>
    %389 = tpu.reciprocal %388 {approx = true} : vector<8x128xf32> -> vector<8x128xf32>
    %390 = arith.mulf %384, %389 : vector<8x128xf32>
    %cst_127 = arith.constant 0.000000e+00 : f32
    %391 = arith.cmpf ogt, %361, %cst_127 : f32
    %cst_128 = arith.constant 0.000000e+00 : f32
    %392 = vector.broadcast %cst_128 : f32 to vector<8x128xf32>
    %393 = arith.select %391, %390, %392 : vector<8x128xf32>
    %394 = arith.maximumf %344, %393 : vector<8x128xf32>
    %c6_i32_129 = arith.constant 6 : i32
    %c6_i32_130 = arith.constant 6 : i32
    %395 = arith.muli %c6_i32_129, %c6_i32_130 : i32
    %396 = arith.addi %93, %395 : i32
    %c0_i32_131 = arith.constant 0 : i32
    %397 = arith.addi %396, %c0_i32_131 : i32
    %398 = arith.index_cast %397 : i32 to index
    %399 = memref.load %arg5[%398] : memref<96xf32, #tpu.memory_space<smem>>
    %c1_i32_132 = arith.constant 1 : i32
    %400 = arith.addi %396, %c1_i32_132 : i32
    %401 = arith.index_cast %400 : i32 to index
    %402 = memref.load %arg5[%401] : memref<96xf32, #tpu.memory_space<smem>>
    %c2_i32_133 = arith.constant 2 : i32
    %403 = arith.addi %396, %c2_i32_133 : i32
    %404 = arith.index_cast %403 : i32 to index
    %405 = memref.load %arg5[%404] : memref<96xf32, #tpu.memory_space<smem>>
    %c3_i32_134 = arith.constant 3 : i32
    %406 = arith.addi %396, %c3_i32_134 : i32
    %407 = arith.index_cast %406 : i32 to index
    %408 = memref.load %arg5[%407] : memref<96xf32, #tpu.memory_space<smem>>
    %c4_i32_135 = arith.constant 4 : i32
    %409 = arith.addi %396, %c4_i32_135 : i32
    %410 = arith.index_cast %409 : i32 to index
    %411 = memref.load %arg5[%410] : memref<96xf32, #tpu.memory_space<smem>>
    %cst_136 = arith.constant 5.000000e-01 : f32
    %412 = arith.mulf %405, %cst_136 : f32
    %413 = arith.subf %399, %412 : f32
    %cst_137 = arith.constant 5.000000e-01 : f32
    %414 = arith.mulf %405, %cst_137 : f32
    %415 = arith.addf %399, %414 : f32
    %cst_138 = arith.constant 5.000000e-01 : f32
    %416 = arith.mulf %408, %cst_138 : f32
    %417 = arith.subf %402, %416 : f32
    %cst_139 = arith.constant 5.000000e-01 : f32
    %418 = arith.mulf %408, %cst_139 : f32
    %419 = arith.addf %402, %418 : f32
    %420 = vector.broadcast %415 : f32 to vector<8x128xf32>
    %421 = arith.minimumf %420, %85 : vector<8x128xf32>
    %422 = vector.broadcast %413 : f32 to vector<8x128xf32>
    %423 = arith.maximumf %422, %82 : vector<8x128xf32>
    %424 = arith.subf %421, %423 : vector<8x128xf32>
    %cst_140 = arith.constant 0.000000e+00 : f32
    %425 = vector.broadcast %cst_140 : f32 to vector<8x128xf32>
    %426 = arith.maximumf %424, %425 : vector<8x128xf32>
    %427 = vector.broadcast %419 : f32 to vector<8x128xf32>
    %428 = arith.minimumf %427, %91 : vector<8x128xf32>
    %429 = vector.broadcast %417 : f32 to vector<8x128xf32>
    %430 = arith.maximumf %429, %88 : vector<8x128xf32>
    %431 = arith.subf %428, %430 : vector<8x128xf32>
    %cst_141 = arith.constant 0.000000e+00 : f32
    %432 = vector.broadcast %cst_141 : f32 to vector<8x128xf32>
    %433 = arith.maximumf %431, %432 : vector<8x128xf32>
    %434 = arith.mulf %426, %433 : vector<8x128xf32>
    %435 = arith.mulf %405, %408 : f32
    %436 = vector.broadcast %435 : f32 to vector<8x128xf32>
    %437 = arith.addf %436, %92 : vector<8x128xf32>
    %438 = arith.subf %437, %434 : vector<8x128xf32>
    %439 = tpu.reciprocal %438 {approx = true} : vector<8x128xf32> -> vector<8x128xf32>
    %440 = arith.mulf %434, %439 : vector<8x128xf32>
    %cst_142 = arith.constant 0.000000e+00 : f32
    %441 = arith.cmpf ogt, %411, %cst_142 : f32
    %cst_143 = arith.constant 0.000000e+00 : f32
    %442 = vector.broadcast %cst_143 : f32 to vector<8x128xf32>
    %443 = arith.select %441, %440, %442 : vector<8x128xf32>
    %444 = arith.maximumf %394, %443 : vector<8x128xf32>
    %c7_i32 = arith.constant 7 : i32
    %c6_i32_144 = arith.constant 6 : i32
    %445 = arith.muli %c7_i32, %c6_i32_144 : i32
    %446 = arith.addi %93, %445 : i32
    %c0_i32_145 = arith.constant 0 : i32
    %447 = arith.addi %446, %c0_i32_145 : i32
    %448 = arith.index_cast %447 : i32 to index
    %449 = memref.load %arg5[%448] : memref<96xf32, #tpu.memory_space<smem>>
    %c1_i32_146 = arith.constant 1 : i32
    %450 = arith.addi %446, %c1_i32_146 : i32
    %451 = arith.index_cast %450 : i32 to index
    %452 = memref.load %arg5[%451] : memref<96xf32, #tpu.memory_space<smem>>
    %c2_i32_147 = arith.constant 2 : i32
    %453 = arith.addi %446, %c2_i32_147 : i32
    %454 = arith.index_cast %453 : i32 to index
    %455 = memref.load %arg5[%454] : memref<96xf32, #tpu.memory_space<smem>>
    %c3_i32_148 = arith.constant 3 : i32
    %456 = arith.addi %446, %c3_i32_148 : i32
    %457 = arith.index_cast %456 : i32 to index
    %458 = memref.load %arg5[%457] : memref<96xf32, #tpu.memory_space<smem>>
    %c4_i32_149 = arith.constant 4 : i32
    %459 = arith.addi %446, %c4_i32_149 : i32
    %460 = arith.index_cast %459 : i32 to index
    %461 = memref.load %arg5[%460] : memref<96xf32, #tpu.memory_space<smem>>
    %cst_150 = arith.constant 5.000000e-01 : f32
    %462 = arith.mulf %455, %cst_150 : f32
    %463 = arith.subf %449, %462 : f32
    %cst_151 = arith.constant 5.000000e-01 : f32
    %464 = arith.mulf %455, %cst_151 : f32
    %465 = arith.addf %449, %464 : f32
    %cst_152 = arith.constant 5.000000e-01 : f32
    %466 = arith.mulf %458, %cst_152 : f32
    %467 = arith.subf %452, %466 : f32
    %cst_153 = arith.constant 5.000000e-01 : f32
    %468 = arith.mulf %458, %cst_153 : f32
    %469 = arith.addf %452, %468 : f32
    %470 = vector.broadcast %465 : f32 to vector<8x128xf32>
    %471 = arith.minimumf %470, %85 : vector<8x128xf32>
    %472 = vector.broadcast %463 : f32 to vector<8x128xf32>
    %473 = arith.maximumf %472, %82 : vector<8x128xf32>
    %474 = arith.subf %471, %473 : vector<8x128xf32>
    %cst_154 = arith.constant 0.000000e+00 : f32
    %475 = vector.broadcast %cst_154 : f32 to vector<8x128xf32>
    %476 = arith.maximumf %474, %475 : vector<8x128xf32>
    %477 = vector.broadcast %469 : f32 to vector<8x128xf32>
    %478 = arith.minimumf %477, %91 : vector<8x128xf32>
    %479 = vector.broadcast %467 : f32 to vector<8x128xf32>
    %480 = arith.maximumf %479, %88 : vector<8x128xf32>
    %481 = arith.subf %478, %480 : vector<8x128xf32>
    %cst_155 = arith.constant 0.000000e+00 : f32
    %482 = vector.broadcast %cst_155 : f32 to vector<8x128xf32>
    %483 = arith.maximumf %481, %482 : vector<8x128xf32>
    %484 = arith.mulf %476, %483 : vector<8x128xf32>
    %485 = arith.mulf %455, %458 : f32
    %486 = vector.broadcast %485 : f32 to vector<8x128xf32>
    %487 = arith.addf %486, %92 : vector<8x128xf32>
    %488 = arith.subf %487, %484 : vector<8x128xf32>
    %489 = tpu.reciprocal %488 {approx = true} : vector<8x128xf32> -> vector<8x128xf32>
    %490 = arith.mulf %484, %489 : vector<8x128xf32>
    %cst_156 = arith.constant 0.000000e+00 : f32
    %491 = arith.cmpf ogt, %461, %cst_156 : f32
    %cst_157 = arith.constant 0.000000e+00 : f32
    %492 = vector.broadcast %cst_157 : f32 to vector<8x128xf32>
    %493 = arith.select %491, %490, %492 : vector<8x128xf32>
    %494 = arith.maximumf %444, %493 : vector<8x128xf32>
    %c8_i32 = arith.constant 8 : i32
    %cst_158 = arith.constant 5.000000e-01 : f32
    %495 = vector.broadcast %cst_158 : f32 to vector<8x128xf32>
    %496 = arith.cmpf ogt, %494, %495 : vector<8x128xf32>
    %c0_159 = arith.constant 0 : index
    %c0_160 = arith.constant 0 : index
    %c0_161 = arith.constant 0 : index
    %497 = vector.load %arg4[%c0_159, %c0_160, %c0_161] : memref<1x8x128xf32, #tpu.memory_space<vmem>>, vector<1x8x128xf32>
    %498 = vector.shape_cast %497 : vector<1x8x128xf32> to vector<8x128xf32>
    %cst_162 = arith.constant 0.000000e+00 : f32
    %499 = vector.broadcast %cst_162 : f32 to vector<8x128xf32>
    %500 = arith.select %496, %499, %498 : vector<8x128xi1>, vector<8x128xf32>
    %c0_163 = arith.constant 0 : index
    %c4_164 = arith.constant 4 : index
    %c0_165 = arith.constant 0 : index
    %c0_166 = arith.constant 0 : index
    %501 = vector.load %arg3[%c0_163, %c4_164, %c0_165, %c0_166] : memref<1x9x8x128xf32, #tpu.memory_space<vmem>>, vector<1x1x8x128xf32>
    %502 = vector.shape_cast %501 : vector<1x1x8x128xf32> to vector<8x128xf32>
    %cst_167 = arith.constant -16.1180954 : f32
    %cst_168 = arith.constant 16.1180954 : f32
    %503 = vector.broadcast %cst_167 : f32 to vector<8x128xf32>
    %504 = arith.maximumf %503, %14 : vector<8x128xf32>
    %505 = vector.broadcast %cst_168 : f32 to vector<8x128xf32>
    %506 = arith.minimumf %505, %504 : vector<8x128xf32>
    %cst_169 = arith.constant 0.000000e+00 : f32
    %507 = vector.broadcast %cst_169 : f32 to vector<8x128xf32>
    %508 = arith.maximumf %506, %507 : vector<8x128xf32>
    %509 = arith.mulf %506, %502 : vector<8x128xf32>
    %510 = arith.subf %508, %509 : vector<8x128xf32>
    %511 = math.absf %506 : vector<8x128xf32>
    %cst_170 = arith.constant 0.000000e+00 : f32
    %512 = vector.broadcast %cst_170 : f32 to vector<8x128xf32>
    %513 = arith.subf %512, %511 : vector<8x128xf32>
    %514 = math.exp %513 : vector<8x128xf32>
    %cst_171 = arith.constant 1.000000e+00 : f32
    %515 = vector.broadcast %cst_171 : f32 to vector<8x128xf32>
    %516 = arith.addf %515, %514 : vector<8x128xf32>
    %517 = math.log %516 : vector<8x128xf32>
    %518 = arith.addf %510, %517 : vector<8x128xf32>
    %519 = arith.maximumf %500, %502 : vector<8x128xf32>
    %cst_172 = arith.constant 5.000000e-01 : f32
    %520 = vector.broadcast %cst_172 : f32 to vector<8x128xf32>
    %521 = arith.cmpf ogt, %519, %520 : vector<8x128xf32>
    %cst_173 = arith.constant 0.000000e+00 : f32
    %522 = vector.broadcast %cst_173 : f32 to vector<8x128xf32>
    %523 = arith.select %521, %518, %522 : vector<8x128xi1>, vector<8x128xf32>
    %524 = vector.shape_cast %523 : vector<8x128xf32> to vector<1x8x128xf32>
    %cst_174 = arith.constant dense<0.000000e+00> : vector<1xf32>
    %525 = vector.multi_reduction <add>, %524, %cst_174 [1, 2] : vector<1x8x128xf32> to vector<1xf32>
    %526 = vector.shape_cast %525 : vector<1xf32> to vector<1x1x1xf32>
    %527 = vector.extract %526[0, 0, 0] : f32 from vector<1x1x1xf32>
    %528 = vector.shape_cast %519 : vector<8x128xf32> to vector<1x8x128xf32>
    %cst_175 = arith.constant dense<0.000000e+00> : vector<1xf32>
    %529 = vector.multi_reduction <add>, %528, %cst_175 [1, 2] : vector<1x8x128xf32> to vector<1xf32>
    %530 = vector.shape_cast %529 : vector<1xf32> to vector<1x1x1xf32>
    %531 = vector.extract %530[0, 0, 0] : f32 from vector<1x1x1xf32>
    %c3_176 = arith.constant 3 : index
    %532 = memref.load %arg7[%c3_176] : memref<8xf32, #tpu.memory_space<smem>>
    %533 = arith.addf %532, %527 : f32
    %c3_177 = arith.constant 3 : index
    %534 = memref.load %arg7[%c3_177] : memref<8xf32, #tpu.memory_space<smem>>
    memref.store %533, %arg7[%c3_177] : memref<8xf32, #tpu.memory_space<smem>>
    %c4_178 = arith.constant 4 : index
    %535 = memref.load %arg7[%c4_178] : memref<8xf32, #tpu.memory_space<smem>>
    %536 = arith.addf %535, %531 : f32
    %c4_179 = arith.constant 4 : index
    %537 = memref.load %arg7[%c4_179] : memref<8xf32, #tpu.memory_space<smem>>
    memref.store %536, %arg7[%c4_179] : memref<8xf32, #tpu.memory_space<smem>>
    %538 = vector.shape_cast %502 : vector<8x128xf32> to vector<1x8x128xf32>
    %cst_180 = arith.constant dense<0.000000e+00> : vector<1xf32>
    %539 = vector.multi_reduction <add>, %538, %cst_180 [1, 2] : vector<1x8x128xf32> to vector<1xf32>
    %540 = vector.shape_cast %539 : vector<1xf32> to vector<1x1x1xf32>
    %541 = vector.extract %540[0, 0, 0] : f32 from vector<1x1x1xf32>
    %cst_181 = arith.constant 0.000000e+00 : f32
    %542 = arith.cmpf ogt, %541, %cst_181 : f32
    %543 = arith.extui %542 : i1 to i32
    %c0_i32_182 = arith.constant 0 : i32
    %544 = arith.cmpi ne, %543, %c0_i32_182 : i32
    scf.if %544 {
      %c0_186 = arith.constant 0 : index
      %c0_187 = arith.constant 0 : index
      %c0_188 = arith.constant 0 : index
      %c0_189 = arith.constant 0 : index
      %550 = vector.load %arg3[%c0_186, %c0_187, %c0_188, %c0_189] : memref<1x9x8x128xf32, #tpu.memory_space<vmem>>, vector<1x1x8x128xf32>
      %551 = vector.shape_cast %550 : vector<1x1x8x128xf32> to vector<8x128xf32>
      %c0_190 = arith.constant 0 : index
      %c1_191 = arith.constant 1 : index
      %c0_192 = arith.constant 0 : index
      %c0_193 = arith.constant 0 : index
      %552 = vector.load %arg3[%c0_190, %c1_191, %c0_192, %c0_193] : memref<1x9x8x128xf32, #tpu.memory_space<vmem>>, vector<1x1x8x128xf32>
      %553 = vector.shape_cast %552 : vector<1x1x8x128xf32> to vector<8x128xf32>
      %c0_194 = arith.constant 0 : index
      %c2_195 = arith.constant 2 : index
      %c0_196 = arith.constant 0 : index
      %c0_197 = arith.constant 0 : index
      %554 = vector.load %arg3[%c0_194, %c2_195, %c0_196, %c0_197] : memref<1x9x8x128xf32, #tpu.memory_space<vmem>>, vector<1x1x8x128xf32>
      %555 = vector.shape_cast %554 : vector<1x1x8x128xf32> to vector<8x128xf32>
      %c0_198 = arith.constant 0 : index
      %c3_199 = arith.constant 3 : index
      %c0_200 = arith.constant 0 : index
      %c0_201 = arith.constant 0 : index
      %556 = vector.load %arg3[%c0_198, %c3_199, %c0_200, %c0_201] : memref<1x9x8x128xf32, #tpu.memory_space<vmem>>, vector<1x1x8x128xf32>
      %557 = vector.shape_cast %556 : vector<1x1x8x128xf32> to vector<8x128xf32>
      %cst_202 = arith.constant 5.000000e-01 : f32
      %558 = vector.broadcast %cst_202 : f32 to vector<8x128xf32>
      %559 = arith.mulf %555, %558 : vector<8x128xf32>
      %560 = arith.subf %551, %559 : vector<8x128xf32>
      %cst_203 = arith.constant 5.000000e-01 : f32
      %561 = vector.broadcast %cst_203 : f32 to vector<8x128xf32>
      %562 = arith.mulf %555, %561 : vector<8x128xf32>
      %563 = arith.addf %551, %562 : vector<8x128xf32>
      %cst_204 = arith.constant 5.000000e-01 : f32
      %564 = vector.broadcast %cst_204 : f32 to vector<8x128xf32>
      %565 = arith.mulf %557, %564 : vector<8x128xf32>
      %566 = arith.subf %553, %565 : vector<8x128xf32>
      %cst_205 = arith.constant 5.000000e-01 : f32
      %567 = vector.broadcast %cst_205 : f32 to vector<8x128xf32>
      %568 = arith.mulf %557, %567 : vector<8x128xf32>
      %569 = arith.addf %553, %568 : vector<8x128xf32>
      %570 = arith.minimumf %85, %563 : vector<8x128xf32>
      %571 = arith.maximumf %82, %560 : vector<8x128xf32>
      %572 = arith.subf %570, %571 : vector<8x128xf32>
      %cst_206 = arith.constant 0.000000e+00 : f32
      %573 = vector.broadcast %cst_206 : f32 to vector<8x128xf32>
      %574 = arith.maximumf %572, %573 : vector<8x128xf32>
      %575 = arith.minimumf %91, %569 : vector<8x128xf32>
      %576 = arith.maximumf %88, %566 : vector<8x128xf32>
      %577 = arith.subf %575, %576 : vector<8x128xf32>
      %cst_207 = arith.constant 0.000000e+00 : f32
      %578 = vector.broadcast %cst_207 : f32 to vector<8x128xf32>
      %579 = arith.maximumf %577, %578 : vector<8x128xf32>
      %580 = arith.mulf %574, %579 : vector<8x128xf32>
      %581 = arith.mulf %555, %557 : vector<8x128xf32>
      %582 = arith.addf %92, %581 : vector<8x128xf32>
      %583 = arith.subf %582, %580 : vector<8x128xf32>
      %584 = arith.divf %580, %583 : vector<8x128xf32>
      %585 = arith.maximumf %85, %563 : vector<8x128xf32>
      %586 = arith.minimumf %82, %560 : vector<8x128xf32>
      %587 = arith.subf %585, %586 : vector<8x128xf32>
      %cst_208 = arith.constant 0.000000e+00 : f32
      %588 = vector.broadcast %cst_208 : f32 to vector<8x128xf32>
      %589 = arith.maximumf %587, %588 : vector<8x128xf32>
      %590 = arith.maximumf %91, %569 : vector<8x128xf32>
      %591 = arith.minimumf %88, %566 : vector<8x128xf32>
      %592 = arith.subf %590, %591 : vector<8x128xf32>
      %cst_209 = arith.constant 0.000000e+00 : f32
      %593 = vector.broadcast %cst_209 : f32 to vector<8x128xf32>
      %594 = arith.maximumf %592, %593 : vector<8x128xf32>
      %595 = arith.mulf %589, %594 : vector<8x128xf32>
      %596 = arith.subf %595, %583 : vector<8x128xf32>
      %597 = arith.divf %596, %595 : vector<8x128xf32>
      %598 = arith.subf %584, %597 : vector<8x128xf32>
      %cst_210 = arith.constant 5.000000e-01 : f32
      %599 = vector.broadcast %cst_210 : f32 to vector<8x128xf32>
      %600 = arith.cmpf ogt, %502, %599 : vector<8x128xf32>
      %cst_211 = arith.constant 1.000000e+00 : f32
      %601 = vector.broadcast %cst_211 : f32 to vector<8x128xf32>
      %602 = arith.subf %601, %598 : vector<8x128xf32>
      %cst_212 = arith.constant 0.000000e+00 : f32
      %603 = vector.broadcast %cst_212 : f32 to vector<8x128xf32>
      %604 = arith.select %600, %602, %603 : vector<8x128xi1>, vector<8x128xf32>
      %605 = vector.shape_cast %604 : vector<8x128xf32> to vector<1x8x128xf32>
      %cst_213 = arith.constant dense<0.000000e+00> : vector<1xf32>
      %606 = vector.multi_reduction <add>, %605, %cst_213 [1, 2] : vector<1x8x128xf32> to vector<1xf32>
      %607 = vector.shape_cast %606 : vector<1xf32> to vector<1x1x1xf32>
      %608 = vector.extract %607[0, 0, 0] : f32 from vector<1x1x1xf32>
      %c0_214 = arith.constant 0 : index
      %c5 = arith.constant 5 : index
      %c0_215 = arith.constant 0 : index
      %c0_216 = arith.constant 0 : index
      %609 = vector.load %arg2[%c0_214, %c5, %c0_215, %c0_216] : memref<1x9x8x128xf32, #tpu.memory_space<vmem>>, vector<1x4x8x128xf32>
      %610 = vector.shape_cast %609 : vector<1x4x8x128xf32> to vector<4x8x128xf32>
      %c0_217 = arith.constant 0 : index
      %c5_218 = arith.constant 5 : index
      %c0_219 = arith.constant 0 : index
      %c0_220 = arith.constant 0 : index
      %611 = vector.load %arg3[%c0_217, %c5_218, %c0_219, %c0_220] : memref<1x9x8x128xf32, #tpu.memory_space<vmem>>, vector<1x4x8x128xf32>
      %612 = vector.shape_cast %611 : vector<1x4x8x128xf32> to vector<4x8x128xf32>
      %cst_221 = arith.constant 1.000000e-07 : f32
      %cst_222 = arith.constant 0.99999988 : f32
      %613 = vector.broadcast %cst_221 : f32 to vector<4x8x128xf32>
      %614 = arith.maximumf %613, %610 : vector<4x8x128xf32>
      %615 = vector.broadcast %cst_222 : f32 to vector<4x8x128xf32>
      %616 = arith.minimumf %615, %614 : vector<4x8x128xf32>
      %cst_223 = arith.constant 0.000000e+00 : f32
      %617 = vector.broadcast %cst_223 : f32 to vector<4x8x128xf32>
      %618 = arith.subf %617, %612 : vector<4x8x128xf32>
      %619 = math.log %616 : vector<4x8x128xf32>
      %620 = arith.mulf %618, %619 : vector<4x8x128xf32>
      %cst_224 = arith.constant 1.000000e+00 : f32
      %621 = vector.broadcast %cst_224 : f32 to vector<4x8x128xf32>
      %622 = arith.subf %621, %612 : vector<4x8x128xf32>
      %cst_225 = arith.constant 1.000000e+00 : f32
      %623 = vector.broadcast %cst_225 : f32 to vector<4x8x128xf32>
      %624 = arith.subf %623, %616 : vector<4x8x128xf32>
      %625 = math.log %624 : vector<4x8x128xf32>
      %626 = arith.mulf %622, %625 : vector<4x8x128xf32>
      %627 = arith.subf %620, %626 : vector<4x8x128xf32>
      %cst_226 = arith.constant dense<0.000000e+00> : vector<8x128xf32>
      %628 = vector.multi_reduction <add>, %627, %cst_226 [0] : vector<4x8x128xf32> to vector<8x128xf32>
      %cst_227 = arith.constant 5.000000e-01 : f32
      %629 = vector.broadcast %cst_227 : f32 to vector<8x128xf32>
      %630 = arith.cmpf ogt, %502, %629 : vector<8x128xf32>
      %cst_228 = arith.constant 0.000000e+00 : f32
      %631 = vector.broadcast %cst_228 : f32 to vector<8x128xf32>
      %632 = arith.select %630, %628, %631 : vector<8x128xi1>, vector<8x128xf32>
      %633 = vector.shape_cast %632 : vector<8x128xf32> to vector<1x8x128xf32>
      %cst_229 = arith.constant dense<0.000000e+00> : vector<1xf32>
      %634 = vector.multi_reduction <add>, %633, %cst_229 [1, 2] : vector<1x8x128xf32> to vector<1xf32>
      %635 = vector.shape_cast %634 : vector<1xf32> to vector<1x1x1xf32>
      %636 = vector.extract %635[0, 0, 0] : f32 from vector<1x1x1xf32>
      %c0_230 = arith.constant 0 : index
      %637 = memref.load %arg7[%c0_230] : memref<8xf32, #tpu.memory_space<smem>>
      %638 = arith.addf %637, %608 : f32
      %c0_231 = arith.constant 0 : index
      %639 = memref.load %arg7[%c0_231] : memref<8xf32, #tpu.memory_space<smem>>
      memref.store %638, %arg7[%c0_231] : memref<8xf32, #tpu.memory_space<smem>>
      %c1_232 = arith.constant 1 : index
      %640 = memref.load %arg7[%c1_232] : memref<8xf32, #tpu.memory_space<smem>>
      %641 = arith.addf %640, %541 : f32
      %c1_233 = arith.constant 1 : index
      %642 = memref.load %arg7[%c1_233] : memref<8xf32, #tpu.memory_space<smem>>
      memref.store %641, %arg7[%c1_233] : memref<8xf32, #tpu.memory_space<smem>>
      %c2_234 = arith.constant 2 : index
      %643 = memref.load %arg7[%c2_234] : memref<8xf32, #tpu.memory_space<smem>>
      %644 = arith.addf %643, %636 : f32
      %c2_235 = arith.constant 2 : index
      %645 = memref.load %arg7[%c2_235] : memref<8xf32, #tpu.memory_space<smem>>
      memref.store %644, %arg7[%c2_235] : memref<8xf32, #tpu.memory_space<smem>>
    } else {
    }
    %c1_i32_183 = arith.constant 1 : i32
    %545 = arith.cmpi eq, %arg0, %c1_i32_183 : i32
    %c0_i32_184 = arith.constant 0 : i32
    %546 = arith.cmpi eq, %arg1, %c0_i32_184 : i32
    %547 = arith.andi %545, %546 : i1
    %548 = arith.extui %547 : i1 to i32
    %c0_i32_185 = arith.constant 0 : i32
    %549 = arith.cmpi ne, %548, %c0_i32_185 : i32
    scf.if %549 {
      %c0_186 = arith.constant 0 : index
      %550 = memref.load %arg7[%c0_186] : memref<8xf32, #tpu.memory_space<smem>>
      %c0_187 = arith.constant 0 : index
      %551 = memref.load %arg6[%c0_187] : memref<8xf32, #tpu.memory_space<smem>>
      memref.store %550, %arg6[%c0_187] : memref<8xf32, #tpu.memory_space<smem>>
      %c1_188 = arith.constant 1 : index
      %552 = memref.load %arg7[%c1_188] : memref<8xf32, #tpu.memory_space<smem>>
      %c1_189 = arith.constant 1 : index
      %553 = memref.load %arg6[%c1_189] : memref<8xf32, #tpu.memory_space<smem>>
      memref.store %552, %arg6[%c1_189] : memref<8xf32, #tpu.memory_space<smem>>
      %c2_190 = arith.constant 2 : index
      %554 = memref.load %arg7[%c2_190] : memref<8xf32, #tpu.memory_space<smem>>
      %c2_191 = arith.constant 2 : index
      %555 = memref.load %arg6[%c2_191] : memref<8xf32, #tpu.memory_space<smem>>
      memref.store %554, %arg6[%c2_191] : memref<8xf32, #tpu.memory_space<smem>>
      %c3_192 = arith.constant 3 : index
      %556 = memref.load %arg7[%c3_192] : memref<8xf32, #tpu.memory_space<smem>>
      %c3_193 = arith.constant 3 : index
      %557 = memref.load %arg6[%c3_193] : memref<8xf32, #tpu.memory_space<smem>>
      memref.store %556, %arg6[%c3_193] : memref<8xf32, #tpu.memory_space<smem>>
      %c4_194 = arith.constant 4 : index
      %558 = memref.load %arg7[%c4_194] : memref<8xf32, #tpu.memory_space<smem>>
      %c4_195 = arith.constant 4 : index
      %559 = memref.load %arg6[%c4_195] : memref<8xf32, #tpu.memory_space<smem>>
      memref.store %558, %arg6[%c4_195] : memref<8xf32, #tpu.memory_space<smem>>
      %c5 = arith.constant 5 : index
      %560 = memref.load %arg7[%c5] : memref<8xf32, #tpu.memory_space<smem>>
      %c5_196 = arith.constant 5 : index
      %561 = memref.load %arg6[%c5_196] : memref<8xf32, #tpu.memory_space<smem>>
      memref.store %560, %arg6[%c5_196] : memref<8xf32, #tpu.memory_space<smem>>
      %c6 = arith.constant 6 : index
      %562 = memref.load %arg7[%c6] : memref<8xf32, #tpu.memory_space<smem>>
      %c6_197 = arith.constant 6 : index
      %563 = memref.load %arg6[%c6_197] : memref<8xf32, #tpu.memory_space<smem>>
      memref.store %562, %arg6[%c6_197] : memref<8xf32, #tpu.memory_space<smem>>
      %c7 = arith.constant 7 : index
      %564 = memref.load %arg7[%c7] : memref<8xf32, #tpu.memory_space<smem>>
      %c7_198 = arith.constant 7 : index
      %565 = memref.load %arg6[%c7_198] : memref<8xf32, #tpu.memory_space<smem>>
      memref.store %564, %arg6[%c7_198] : memref<8xf32, #tpu.memory_space<smem>>
    } else {
    }
    return
  }
  func.func @transform_0(%arg0: i32, %arg1: i32) -> (i32, i32, i32, i32) {
    %c0_i32 = arith.constant 0 : i32
    %c0_i32_0 = arith.constant 0 : i32
    %c0_i32_1 = arith.constant 0 : i32
    return %arg0, %c0_i32, %arg1, %c0_i32_0 : i32, i32, i32, i32
  }
  func.func @transform_1(%arg0: i32, %arg1: i32) -> (i32, i32, i32, i32) {
    %c0_i32 = arith.constant 0 : i32
    %c0_i32_0 = arith.constant 0 : i32
    %c0_i32_1 = arith.constant 0 : i32
    return %arg0, %c0_i32, %arg1, %c0_i32_0 : i32, i32, i32, i32
  }
  func.func @transform_2(%arg0: i32, %arg1: i32) -> (i32, i32, i32) {
    %c0_i32 = arith.constant 0 : i32
    %c0_i32_0 = arith.constant 0 : i32
    return %arg0, %arg1, %c0_i32 : i32, i32, i32
  }
  func.func @transform_3(%arg0: i32, %arg1: i32) -> i32 {
    %c0_i32 = arith.constant 0 : i32
    %c0_i32_0 = arith.constant 0 : i32
    return %c0_i32 : i32
  }
  func.func @transform_4(%arg0: i32, %arg1: i32) -> i32 {
    %c0_i32 = arith.constant 0 : i32
    %c0_i32_0 = arith.constant 0 : i32
    return %c0_i32 : i32
  }
}

</mosaic_0001>

<llo_original>
// kernel: tpu_custom_call.1
$region0: #{tpu_custom_call.1}
  #allocation0 [shape = 'u32[]', space=smem, size = 0x4, offset = 0x4, fixed_abs, tag = 'smem constant byte address 0x4 - core index']
  #allocation1 [shape = 'u32[144,128]{1,0:T(1,128)}', space=vmem, size = 0x12000, scoped, tag = 'internal scratch']
  #allocation2 [shape = 'f32[8]{0:T(128)}', space=smem, size = 0x200, scoped, tag = 'scratch operand']
  %s0 = inlined_call_operand.hbm [shape: f32[2,9,8,128], index: 0, kind: input, shape index: {}]
  %s1 = inlined_call_operand.hbm [shape: f32[2,9,8,128], index: 1, kind: input, shape index: {}]
  %s2 = inlined_call_operand.hbm [shape: f32[2,8,128], index: 2, kind: input, shape index: {}]
  %s3 = inlined_call_operand.vmem [shape: f32[96], index: 3, kind: input, shape index: {}]
  %s4 = inlined_call_operand.hbm [shape: f32[8], index: 4, kind: output, shape index: {}]
  %s5 = sld [smem:[#allocation0]]
  $region77: #{tpu_custom_call.1} parent=0
    _
  %s7 = ssub.s32 1, %s5
  %s8 = scalar_select 0, %s7, %s5
  $region1: #{tpu_custom_call.1} parent=0
    #allocation3 [shape = 'u8[73728]{0}', space=vmem, size = 0x12000, scoped, tag = 'input window, operand 0']
    #allocation4 [shape = 's32[2]{0}', space=sflag, size = 0x8, scoped, tag = 'scoped memory for tpu_custom_call.1']
    #allocation5 [shape = 's32[2]{0}', space=sflag, size = 0x8, scoped, tag = 'scoped memory for tpu_custom_call.1']
    #allocation6 [shape = 's32[2]{0}', space=sflag, size = 0x8, scoped, tag = 'scoped memory for tpu_custom_call.1']
    #allocation7 [shape = 'u8[73728]{0}', space=vmem, size = 0x12000, scoped, tag = 'input window, operand 1']
    #allocation8 [shape = 's32[2]{0}', space=sflag, size = 0x8, scoped, tag = 'scoped memory for tpu_custom_call.1']
    #allocation9 [shape = 'u8[8192]{0}', space=vmem, size = 0x2000, scoped, tag = 'input window, operand 2']
    #allocation10 [shape = 'u8[512]{0}', space=smem, size = 0x200, scoped, tag = 'input window, operand 3, single buffered']
    #allocation11 [shape = 'u8[512]{0}', space=smem, size = 0x200, scoped, tag = 'output window, operand 0, single buffered']
    %9 = vsyncpa [#allocation4], 0
    %s10 = scalar_lea.sflag [#allocation4], 1
    %11 = vsyncpa %s10, 0
    %12 = vsyncpa [#allocation8], 0
    %s13 = scalar_lea.sflag [#allocation8], 1
    %14 = vsyncpa %s13, 0
    %15 = vsyncpa [#allocation6], 0
    %16 = vsyncpa [#allocation5], 0
    loop: start=0, step=1, limit=4
    $region2: #{tpu_custom_call.1} parent=1 // loop_pre_header
      _
    $region3: #{tpu_custom_call.1} parent=1 // loop_header
      %s18 = sphi 0, %s22
      %p19 = scmp.ge.s32.totalorder %s18, 4
      %s25 = sphi 0, %s37
      %s26 = sphi 0, %s33
      %s27 = sphi 0, %s25
      %s28 = sphi 0, %s26
      %s29 = sphi 0, %s27
      %s30 = sphi 0, %s28
      %s42 = sphi 0, %s44
      %s45 = sphi 0, %s42
      %s46 = sphi 0, %s45
      %s62 = sphi 0, %s46
      %s70 = sphi 0, %s72
      %s73 = sphi 0, %s70
      %s74 = sphi 0, %s73
      %s90 = sphi 0, %s74
      %s98 = sphi 0, %s100
      %s101 = sphi 0, %s98
      %s102 = sphi 0, %s101
      %s118 = sphi 0, %s102
      %s122 = sphi 0, %s122
      %s124 = sphi 0, %s122
      %s125 = sphi 0, %s124
      %s139 = sphi 0, %s125
      %s143 = sphi 0, %s143
      %s145 = sphi 0, %s143
      %s146 = sphi 0, %s145
      %s160 = sphi 0, %s146
    $region4: #{tpu_custom_call.1} parent=1 // loop_header_branch
      %21 = sbr.rel (%p19) target = $region8
    $region5: #{tpu_custom_call.1} parent=1 // loop_body
      %s23 = ssub.s32 %s18, 1
      %s24 = ssub.s32 %s18, 2
      %s31 = sadd.s32 1, %s26
      %p32 = scmp.ge.s32.totalorder %s31, 1
      %s33 = scalar_select %p32, 0, %s31
      %s34 = sadd.s32 1, %s25
      %s35 = scalar_select %p32, %s34, %s25
      %p36 = scmp.ge.s32.totalorder %s35, 2
      %s37 = scalar_select %p36, 0, %s35
      %s38 = ssub.s32 %s25, %s37
      %s39 = ssub.s32 %s26, %s33
      %s40 = sor.u32 %s38, %s39
      %p41 = scmp.eq.s32.totalorder %s40, 0
      %s43 = sadd.s32 %s42, 1
      %s44 = scalar_select %p41, %s42, %s43
      %p47 = pneg %p41
      %p48 = scmp.eq.s32.totalorder %s18, 1
      %p49 = por %p47, %p48
      %p50 = scmp.ne.s32.totalorder %s42, %s45
      %p51 = scmp.eq.s32.totalorder %s18, 0
      %p52 = por %p50, %p51
      %p53 = scmp.ne.s32.totalorder %s42, %s45
      %p54 = scmp.eq.s32.totalorder %s23, 1
      %p55 = por %p53, %p54
      %p56 = scmp.ne.s32.totalorder %s45, %s46
      %p57 = scmp.eq.s32.totalorder %s23, 0
      %p58 = por %p56, %p57
      %p59 = scmp.ne.s32.totalorder %s45, %s46
      %p60 = scmp.eq.s32.totalorder %s24, 1
      %p61 = por %p59, %p60
      %p63 = scmp.ne.s32.totalorder %s46, %s62
      %p64 = scmp.eq.s32.totalorder %s24, 0
      %p65 = por %p63, %p64
      %s66 = ssub.s32 %s25, %s37
      %s67 = ssub.s32 %s26, %s33
      %s68 = sor.u32 %s66, %s67
      %p69 = scmp.eq.s32.totalorder %s68, 0
      %s71 = sadd.s32 %s70, 1
      %s72 = scalar_select %p69, %s70, %s71
      %p75 = pneg %p69
      %p76 = scmp.eq.s32.totalorder %s18, 1
      %p77 = por %p75, %p76
      %p78 = scmp.ne.s32.totalorder %s70, %s73
      %p79 = scmp.eq.s32.totalorder %s18, 0
      %p80 = por %p78, %p79
      %p81 = scmp.ne.s32.totalorder %s70, %s73
      %p82 = scmp.eq.s32.totalorder %s23, 1
      %p83 = por %p81, %p82
      %p84 = scmp.ne.s32.totalorder %s73, %s74
      %p85 = scmp.eq.s32.totalorder %s23, 0
      %p86 = por %p84, %p85
      %p87 = scmp.ne.s32.totalorder %s73, %s74
      %p88 = scmp.eq.s32.totalorder %s24, 1
      %p89 = por %p87, %p88
      %p91 = scmp.ne.s32.totalorder %s74, %s90
      %p92 = scmp.eq.s32.totalorder %s24, 0
      %p93 = por %p91, %p92
      %s94 = ssub.s32 %s25, %s37
      %s95 = ssub.s32 %s26, %s33
      %s96 = sor.u32 %s94, %s95
      %p97 = scmp.eq.s32.totalorder %s96, 0
      %s99 = sadd.s32 %s98, 1
      %s100 = scalar_select %p97, %s98, %s99
      %p103 = pneg %p97
      %p104 = scmp.eq.s32.totalorder %s18, 1
      %p105 = por %p103, %p104
      %p106 = scmp.ne.s32.totalorder %s98, %s101
      %p107 = scmp.eq.s32.totalorder %s18, 0
      %p108 = por %p106, %p107
      %p109 = scmp.ne.s32.totalorder %s98, %s101
      %p110 = scmp.eq.s32.totalorder %s23, 1
      %p111 = por %p109, %p110
      %p112 = scmp.ne.s32.totalorder %s101, %s102
      %p113 = scmp.eq.s32.totalorder %s23, 0
      %p114 = por %p112, %p113
      %p115 = scmp.ne.s32.totalorder %s101, %s102
      %p116 = scmp.eq.s32.totalorder %s24, 1
      %p117 = por %p115, %p116
      %p119 = scmp.ne.s32.totalorder %s102, %s118
      %p120 = scmp.eq.s32.totalorder %s24, 0
      %p121 = por %p119, %p120
      %s123 = sadd.s32 %s122, 1
      %p126 = scmp.eq.s32.totalorder %s18, 1
      %p127 = scmp.ne.s32.totalorder %s122, %s124
      %p128 = scmp.eq.s32.totalorder %s18, 0
      %p129 = por %p127, %p128
      %p130 = scmp.ne.s32.totalorder %s122, %s124
      %p131 = scmp.eq.s32.totalorder %s23, 1
      %p132 = por %p130, %p131
      %p133 = scmp.ne.s32.totalorder %s124, %s125
      %p134 = scmp.eq.s32.totalorder %s23, 0
      %p135 = por %p133, %p134
      %p136 = scmp.ne.s32.totalorder %s124, %s125
      %p137 = scmp.eq.s32.totalorder %s24, 1
      %p138 = por %p136, %p137
      %p140 = scmp.ne.s32.totalorder %s125, %s139
      %p141 = scmp.eq.s32.totalorder %s24, 0
      %p142 = por %p140, %p141
      %s144 = sadd.s32 %s143, 1
      %p147 = scmp.eq.s32.totalorder %s18, 1
      %p148 = scmp.ne.s32.totalorder %s143, %s145
      %p149 = scmp.eq.s32.totalorder %s18, 0
      %p150 = por %p148, %p149
      %p151 = scmp.ne.s32.totalorder %s143, %s145
      %p152 = scmp.eq.s32.totalorder %s23, 1
      %p153 = por %p151, %p152
      %p154 = scmp.ne.s32.totalorder %s145, %s146
      %p155 = scmp.eq.s32.totalorder %s23, 0
      %p156 = por %p154, %p155
      %p157 = scmp.ne.s32.totalorder %s145, %s146
      %p158 = scmp.eq.s32.totalorder %s24, 1
      %p159 = por %p157, %p158
      %p161 = scmp.ne.s32.totalorder %s146, %s160
      %p162 = scmp.eq.s32.totalorder %s24, 0
      %p163 = por %p161, %p162
      %p164 = scmp.le.s32.totalorder 1, %s18
      %p165 = scmp.lt.s32.totalorder %s18, 3
      %p166 = pnand %p164, %p165
      %p167 = pneg %p166
      // Predicated region
      $region9: #{tpu_custom_call.1} parent=5 // pred_check
        _
      $region10: #{tpu_custom_call.1} parent=5 // pred_check_branch
        %169 = sbr.rel (%p166) target = $region12
      $region11: #{tpu_custom_call.1} parent=5 // pred_region
        %s170 = ssub.s32 %s18, 1
        // Predicated region
        $region13: #{tpu_custom_call.1} parent=11 // pred_check
          %p171 = pneg %p135
        $region14: #{tpu_custom_call.1} parent=11 // pred_check_branch
          %173 = sbr.rel (%p171) target = $region16
        $region15: #{tpu_custom_call.1} parent=11 // pred_region
          %s175 = ssub.s32 16, 16
          %176 = vsyncadd [#allocation6], %s175
          %s178 = sshll.u32 %s3, 4
          %s179 = int_to_ptr.vmem [resolvable:$true] %s178
          %181 = dma.vmem_to_smem %s179, 16, [#allocation10], [#allocation6]
        $region16: #{tpu_custom_call.1} parent=11 // pred_fallthru
          _
      $region12: #{tpu_custom_call.1} parent=5 // pred_fallthru
        _
      %p182 = scmp.lt.s32.totalorder %s18, 2
      // Predicated region
      $region17: #{tpu_custom_call.1} parent=5 // pred_check
        %p183 = pneg %p182
      $region18: #{tpu_custom_call.1} parent=5 // pred_check_branch
        %185 = sbr.rel (%p183) target = $region20
      $region19: #{tpu_custom_call.1} parent=5 // pred_region
        // Predicated region
        $region21: #{tpu_custom_call.1} parent=19 // pred_check
          %p186 = pneg %p52
        $region22: #{tpu_custom_call.1} parent=19 // pred_check_branch
          %188 = sbr.rel (%p186) target = $region24
        $region23: #{tpu_custom_call.1} parent=19 // pred_region
          %s189 = sand.u32 %s42, 1
          %s190 = scalar_lea.sflag [#allocation4], %s189
          %s191 = sand.u32 %s42, 1
          %s192 = smul.addr %s191, 72
          %s193 = scalar_lea.vmem [#allocation3], %s192
          %s195 = ssub.s32 1152, 1152
          %196 = vsyncadd %s190, %s195
          %s197 = smul.addr %s25, 9
          %s198 = sadd.s32 %s26, %s197
          %s199 = smul.addr %s198, 128
          %s200 = scalar_lea.hbm %s0, %s199
          %s201 = sshll.u32 %s193, 4
          %s202 = int_to_ptr.vmem [resolvable:$true] %s201
          %207 = dma.hbm_to_vmem [thread:$0]  %s200, 1152, %s202, %s190, 128, 128, 8
        $region24: #{tpu_custom_call.1} parent=19 // pred_fallthru
          _
        // Predicated region
        $region25: #{tpu_custom_call.1} parent=19 // pred_check
          %p208 = pneg %p80
        $region26: #{tpu_custom_call.1} parent=19 // pred_check_branch
          %210 = sbr.rel (%p208) target = $region28
        $region27: #{tpu_custom_call.1} parent=19 // pred_region
          %s211 = sand.u32 %s18, 1
          %s212 = scalar_lea.sflag [#allocation8], %s211
          %s213 = sand.u32 %s70, 1
          %s214 = smul.addr %s213, 72
          %s215 = scalar_lea.vmem [#allocation7], %s214
          %s217 = ssub.s32 1152, 1152
          %218 = vsyncadd %s212, %s217
          %s219 = smul.addr %s25, 9
          %s220 = sadd.s32 %s26, %s219
          %s221 = smul.addr %s220, 128
          %s222 = scalar_lea.hbm %s1, %s221
          %s223 = sshll.u32 %s215, 4
          %s224 = int_to_ptr.vmem [resolvable:$true] %s223
          %229 = dma.hbm_to_vmem [thread:$0]  %s222, 1152, %s224, %s212, 128, 128, 8
        $region28: #{tpu_custom_call.1} parent=19 // pred_fallthru
          _
        // Predicated region
        $region29: #{tpu_custom_call.1} parent=19 // pred_check
          %p230 = pneg %p108
        $region30: #{tpu_custom_call.1} parent=19 // pred_check_branch
          %232 = sbr.rel (%p230) target = $region32
        $region31: #{tpu_custom_call.1} parent=19 // pred_region
          %s233 = sand.u32 %s18, 1
          %s234 = scalar_lea.sflag [#allocation8], %s233
          %s235 = sand.u32 %s98, 1
          %s236 = smul.addr %s235, 8
          %s237 = scalar_lea.vmem [#allocation9], %s236
          %s239 = ssub.s32 128, 128
          %240 = vsyncadd %s234, %s239
          %s241 = sadd.s32 %s26, %s25
          %s242 = smul.addr %s241, 128
          %s243 = scalar_lea.hbm %s2, %s242
          %s245 = sshll.u32 %s237, 4
          %s246 = int_to_ptr.vmem [resolvable:$true] %s245
          %248 = dma.hbm_to_vmem [thread:$0]  %s243, 128, %s246, %s234
        $region32: #{tpu_custom_call.1} parent=19 // pred_fallthru
          _
      $region20: #{tpu_custom_call.1} parent=5 // pred_fallthru
        _
      %p249 = scmp.le.s32.totalorder 1, %s18
      %p250 = scmp.lt.s32.totalorder %s18, 3
      %p251 = pnand %p249, %p250
      %p252 = pneg %p251
      // Predicated region
      $region33: #{tpu_custom_call.1} parent=5 // pred_check
        _
      $region34: #{tpu_custom_call.1} parent=5 // pred_check_branch
        %254 = sbr.rel (%p251) target = $region36
      $region35: #{tpu_custom_call.1} parent=5 // pred_region
        %s255 = ssub.s32 %s18, 1
        %s256 = sand.u32 %s45, 1
        %s257 = scalar_lea.sflag [#allocation4], %s256
        %s258 = sand.u32 %s45, 1
        %s259 = smul.addr %s258, 72
        %s260 = scalar_lea.vmem [#allocation3], %s259
        // Predicated region
        $region37: #{tpu_custom_call.1} parent=35 // pred_check
          %p261 = pneg %p58
        $region38: #{tpu_custom_call.1} parent=35 // pred_check_branch
          %263 = sbr.rel (%p261) target = $region40
        $region39: #{tpu_custom_call.1} parent=35 // pred_region
          %264 = dma.done %s257, 1152
        $region40: #{tpu_custom_call.1} parent=35 // pred_fallthru
          _
        %s265 = sand.u32 %s23, 1
        %s266 = scalar_lea.sflag [#allocation8], %s265
        %s267 = sand.u32 %s73, 1
        %s268 = smul.addr %s267, 72
        %s269 = scalar_lea.vmem [#allocation7], %s268
        // Predicated region
        $region41: #{tpu_custom_call.1} parent=35 // pred_check
          %p270 = pneg %p86
        $region42: #{tpu_custom_call.1} parent=35 // pred_check_branch
          %272 = sbr.rel (%p270) target = $region44
        $region43: #{tpu_custom_call.1} parent=35 // pred_region
          %273 = dma.done %s266, 1152
        $region44: #{tpu_custom_call.1} parent=35 // pred_fallthru
          _
        %s274 = sand.u32 %s23, 1
        %s275 = scalar_lea.sflag [#allocation8], %s274
        %s276 = sand.u32 %s101, 1
        %s277 = smul.addr %s276, 8
        %s278 = scalar_lea.vmem [#allocation9], %s277
        // Predicated region
        $region45: #{tpu_custom_call.1} parent=35 // pred_check
          %p279 = pneg %p114
        $region46: #{tpu_custom_call.1} parent=35 // pred_check_branch
          %281 = sbr.rel (%p279) target = $region48
        $region47: #{tpu_custom_call.1} parent=35 // pred_region
          %282 = dma.done %s275, 128
        $region48: #{tpu_custom_call.1} parent=35 // pred_fallthru
          _
        // Predicated region
        $region49: #{tpu_custom_call.1} parent=35 // pred_check
          %p283 = pneg %p135
        $region50: #{tpu_custom_call.1} parent=35 // pred_check_branch
          %285 = sbr.rel (%p283) target = $region52
        $region51: #{tpu_custom_call.1} parent=35 // pred_region
          %286 = dma.done [#allocation6], 16
        $region52: #{tpu_custom_call.1} parent=35 // pred_fallthru
          _
        %287 = sfence
        %s288 = sand.u32 %s45, 1
        %s289 = scalar_lea.sflag [#allocation4], %s288
        %s290 = sand.u32 %s45, 1
        %s291 = smul.addr %s290, 72
        %s292 = scalar_lea.vmem [#allocation3], %s291
        %p293 = pneg %p58
        %p294 = pneg %p55
        %s295 = sand.u32 %s23, 1
        %s296 = scalar_lea.sflag [#allocation8], %s295
        %s297 = sand.u32 %s73, 1
        %s298 = smul.addr %s297, 72
        %s299 = scalar_lea.vmem [#allocation7], %s298
        %p300 = pneg %p86
        %p301 = pneg %p83
        %s302 = sand.u32 %s23, 1
        %s303 = scalar_lea.sflag [#allocation8], %s302
        %s304 = sand.u32 %s101, 1
        %s305 = smul.addr %s304, 8
        %s306 = scalar_lea.vmem [#allocation9], %s305
        %p307 = pneg %p114
        %p308 = pneg %p111
        %p309 = pneg %p135
        %p310 = pneg %p132
        %p311 = pneg %p156
        %p312 = pneg %p153
        %p313 = scmp.eq.s32.totalorder %s27, 0
        %p314 = scmp.eq.s32.totalorder %s28, 0
        %p315 = pnand %p313, %p314
        %p316 = pneg %p315
        // Predicated region
        $region53: #{tpu_custom_call.1} parent=35 // pred_check
          _
        $region54: #{tpu_custom_call.1} parent=35 // pred_check_branch
          %318 = sbr.rel (%p315) target = $region56
        $region55: #{tpu_custom_call.1} parent=35 // pred_region
          %s319 = scalar_lea.smem [#allocation2], 0
          %320 = sst [smem:[%s319]] 0.0
          %s321 = scalar_lea.smem [#allocation2], 1
          %322 = sst [smem:[%s321]] 0.0
          %s323 = scalar_lea.smem [#allocation2], 2
          %324 = sst [smem:[%s323]] 0.0
          %s325 = scalar_lea.smem [#allocation2], 3
          %326 = sst [smem:[%s325]] 0.0
          %s327 = scalar_lea.smem [#allocation2], 4
          %328 = sst [smem:[%s327]] 0.0
          %s329 = scalar_lea.smem [#allocation2], 5
          %330 = sst [smem:[%s329]] 0.0
          %s331 = scalar_lea.smem [#allocation2], 6
          %332 = sst [smem:[%s331]] 0.0
          %s333 = scalar_lea.smem [#allocation2], 7
          %334 = sst [smem:[%s333]] 0.0
        $region56: #{tpu_custom_call.1} parent=35 // pred_fallthru
          _
        %v335 = vld [vmem:[%s260] sm:$0xff]
        %s336 = scalar_lea.vmem %s260, 8 [#allocation3]
        %v337 = vld [vmem:[%s336] sm:$0xff]
        %s338 = scalar_lea.vmem %s260, 16 [#allocation3]
        %v339 = vld [vmem:[%s338] sm:$0xff]
        %s340 = scalar_lea.vmem %s260, 24 [#allocation3]
        %v341 = vld [vmem:[%s340] sm:$0xff]
        %s342 = scalar_lea.vmem %s260, 32 [#allocation3]
        %v343 = vld [vmem:[%s342] sm:$0xff]
        %v344 = vsub.f32 0.0, %v335
        %v345 = vmul.f32 %v344, 1.442695
        %v346 = vpow.pop %v345
        %v347 = vadd.f32 %v346, 1.0
        %v348 = vrcp.pop %v347
        %v349 = vmul.f32 1.0, %v348
        %v350 = vsub.f32 0.0, %v337
        %v351 = vmul.f32 %v350, 1.442695
        %v352 = vpow.pop %v351
        %v353 = vadd.f32 %v352, 1.0
        %v354 = vrcp.pop %v353
        %v355 = vmul.f32 1.0, %v354
        %v356 = vlaneseq
        %v357 = vshrl.u32 %v356, 7
        %v358 = vcvt.s32.f32 %v357
        %v359 = vlaneseq
        %v360 = vand.u32 %v359, 127
        %v361 = vcvt.s32.f32 %v360
        %s362 = scvt.s32.f32 %s28
        %s363 = smul.f32 %s362, 1024.0
        %v364 = vmul.f32 %v358, 128.0
        %v365 = vstv %s363
        %v366 = vadd.f32 %v365, %v364
        %v367 = vadd.f32 %v366, %v361
        %v368 = vadd.f32 %v367, 0.5
        %v369 = vrcp.pop 256.0
        %v370 = vmul.f32 %v368, %v369
        %v371 = vfloor.f32 %v370
        %v372 = vmul.f32 %v371, 256.0
        %v373 = vsub.f32 %v367, %v372
        %v374 = vadd.f32 %v373, 0.5
        %v375 = vrcp.pop 16.0
        %v376 = vmul.f32 %v374, %v375
        %v377 = vfloor.f32 %v376
        %v378 = vmul.f32 %v377, 16.0
        %v379 = vsub.f32 %v373, %v378
        %vm380 = vcmp.lt.f32.partialorder %v371, 0.5
        %vm381 = vcmp.lt.f32.partialorder %v371, 1.5
        %v382 = vsel %vm381, 4.0, 5.0
        %v383 = vsel %vm380, 3.0, %v382
        %v384 = vsel %vm381, 5.0, 7.0
        %v385 = vsel %vm380, 4.0, %v384
        %v386 = vadd.f32 %v349, %v379
        %v387 = vadd.f32 %v355, %v377
        %v388 = vmul.f32 %v339, 1.442695
        %v389 = vpow.pop %v388
        %v390 = vmul.f32 %v389, %v383
        %v391 = vmul.f32 %v341, 1.442695
        %v392 = vpow.pop %v391
        %v393 = vmul.f32 %v392, %v385
        %v394 = vmul.f32 %v390, 0.5
        %v395 = vsub.f32 %v386, %v394
        %v396 = vadd.f32 %v386, %v394
        %v397 = vmul.f32 %v393, 0.5
        %v398 = vsub.f32 %v387, %v397
        %v399 = vadd.f32 %v387, %v397
        %v400 = vmul.f32 %v390, %v393
        %s401 = smul.u32 %s27, 48
        %s402 = sld [smem:[#allocation10 + %s401]]
        %s403 = sadd.s32 %s401, 1
        %s404 = sld [smem:[#allocation10 + %s403]]
        %s405 = sadd.s32 %s401, 2
        %s406 = sld [smem:[#allocation10 + %s405]]
        %s407 = sadd.s32 %s401, 3
        %s408 = sld [smem:[#allocation10 + %s407]]
        %s409 = sadd.s32 %s401, 4
        %s410 = sld [smem:[#allocation10 + %s409]]
        %s411 = smul.f32 %s406, 0.5
        %s412 = ssub.f32 %s402, %s411
        %s413 = sadd.f32 %s402, %s411
        %s414 = smul.f32 %s408, 0.5
        %s415 = ssub.f32 %s404, %s414
        %s416 = sadd.f32 %s404, %s414
        %v417 = vstv %s413
        %v418 = vmin.f32 %v417, %v396
        %v419 = vstv %s412
        %v420 = vmax.f32 %v419, %v395
        %v421 = vsub.f32 %v418, %v420
        %v422 = vmax.f32 %v421, 0.0
        %v423 = vstv %s416
        %v424 = vmin.f32 %v423, %v399
        %v425 = vstv %s415
        %v426 = vmax.f32 %v425, %v398
        %v427 = vsub.f32 %v424, %v426
        %v428 = vmax.f32 %v427, 0.0
        %v429 = vmul.f32 %v422, %v428
        %s430 = smul.f32 %s406, %s408
        %v431 = vstv %s430
        %v432 = vadd.f32 %v431, %v400
        %v433 = vsub.f32 %v432, %v429
        %v434 = vrcp.pop %v433
        %v435 = vmul.f32 %v429, %v434
        %p436 = scmp.gt.f32.partialorder %s410, 0.0
        %s437 = scalar_select %p436, 1, 0
        %v438 = vstv %s437
        %vm439 = vcmp.eq.s32.totalorder %v438, 1
        %v440 = vsel %vm439, %v435, 0.0
        %v441 = vmax.f32 %v440, 0.0
        %s442 = sadd.s32 %s401, 6
        %s443 = sld [smem:[#allocation10 + %s442]]
        %s444 = sadd.s32 %s401, 7
        %s445 = sld [smem:[#allocation10 + %s444]]
        %s446 = sadd.s32 %s401, 8
        %s447 = sld [smem:[#allocation10 + %s446]]
        %s448 = sadd.s32 %s401, 9
        %s449 = sld [smem:[#allocation10 + %s448]]
        %s450 = sadd.s32 %s401, 10
        %s451 = sld [smem:[#allocation10 + %s450]]
        %s452 = smul.f32 %s447, 0.5
        %s453 = ssub.f32 %s443, %s452
        %s454 = sadd.f32 %s443, %s452
        %s455 = smul.f32 %s449, 0.5
        %s456 = ssub.f32 %s445, %s455
        %s457 = sadd.f32 %s445, %s455
        %v458 = vstv %s454
        %v459 = vmin.f32 %v458, %v396
        %v460 = vstv %s453
        %v461 = vmax.f32 %v460, %v395
        %v462 = vsub.f32 %v459, %v461
        %v463 = vmax.f32 %v462, 0.0
        %v464 = vstv %s457
        %v465 = vmin.f32 %v464, %v399
        %v466 = vstv %s456
        %v467 = vmax.f32 %v466, %v398
        %v468 = vsub.f32 %v465, %v467
        %v469 = vmax.f32 %v468, 0.0
        %v470 = vmul.f32 %v463, %v469
        %s471 = smul.f32 %s447, %s449
        %v472 = vstv %s471
        %v473 = vadd.f32 %v472, %v400
        %v474 = vsub.f32 %v473, %v470
        %v475 = vrcp.pop %v474
        %v476 = vmul.f32 %v470, %v475
        %p477 = scmp.gt.f32.partialorder %s451, 0.0
        %s478 = scalar_select %p477, 1, 0
        %v479 = vstv %s478
        %vm480 = vcmp.eq.s32.totalorder %v479, 1
        %v481 = vsel %vm480, %v476, 0.0
        %v482 = vmax.f32 %v441, %v481
        %s483 = sadd.s32 %s401, 12
        %s484 = sld [smem:[#allocation10 + %s483]]
        %s485 = sadd.s32 %s401, 13
        %s486 = sld [smem:[#allocation10 + %s485]]
        %s487 = sadd.s32 %s401, 14
        %s488 = sld [smem:[#allocation10 + %s487]]
        %s489 = sadd.s32 %s401, 15
        %s490 = sld [smem:[#allocation10 + %s489]]
        %s491 = sadd.s32 %s401, 16
        %s492 = sld [smem:[#allocation10 + %s491]]
        %s493 = smul.f32 %s488, 0.5
        %s494 = ssub.f32 %s484, %s493
        %s495 = sadd.f32 %s484, %s493
        %s496 = smul.f32 %s490, 0.5
        %s497 = ssub.f32 %s486, %s496
        %s498 = sadd.f32 %s486, %s496
        %v499 = vstv %s495
        %v500 = vmin.f32 %v499, %v396
        %v501 = vstv %s494
        %v502 = vmax.f32 %v501, %v395
        %v503 = vsub.f32 %v500, %v502
        %v504 = vmax.f32 %v503, 0.0
        %v505 = vstv %s498
        %v506 = vmin.f32 %v505, %v399
        %v507 = vstv %s497
        %v508 = vmax.f32 %v507, %v398
        %v509 = vsub.f32 %v506, %v508
        %v510 = vmax.f32 %v509, 0.0
        %v511 = vmul.f32 %v504, %v510
        %s512 = smul.f32 %s488, %s490
        %v513 = vstv %s512
        %v514 = vadd.f32 %v513, %v400
        %v515 = vsub.f32 %v514, %v511
        %v516 = vrcp.pop %v515
        %v517 = vmul.f32 %v511, %v516
        %p518 = scmp.gt.f32.partialorder %s492, 0.0
        %s519 = scalar_select %p518, 1, 0
        %v520 = vstv %s519
        %vm521 = vcmp.eq.s32.totalorder %v520, 1
        %v522 = vsel %vm521, %v517, 0.0
        %v523 = vmax.f32 %v482, %v522
        %s524 = sadd.s32 %s401, 18
        %s525 = sld [smem:[#allocation10 + %s524]]
        %s526 = sadd.s32 %s401, 19
        %s527 = sld [smem:[#allocation10 + %s526]]
        %s528 = sadd.s32 %s401, 20
        %s529 = sld [smem:[#allocation10 + %s528]]
        %s530 = sadd.s32 %s401, 21
        %s531 = sld [smem:[#allocation10 + %s530]]
        %s532 = sadd.s32 %s401, 22
        %s533 = sld [smem:[#allocation10 + %s532]]
        %s534 = smul.f32 %s529, 0.5
        %s535 = ssub.f32 %s525, %s534
        %s536 = sadd.f32 %s525, %s534
        %s537 = smul.f32 %s531, 0.5
        %s538 = ssub.f32 %s527, %s537
        %s539 = sadd.f32 %s527, %s537
        %v540 = vstv %s536
        %v541 = vmin.f32 %v540, %v396
        %v542 = vstv %s535
        %v543 = vmax.f32 %v542, %v395
        %v544 = vsub.f32 %v541, %v543
        %v545 = vmax.f32 %v544, 0.0
        %v546 = vstv %s539
        %v547 = vmin.f32 %v546, %v399
        %v548 = vstv %s538
        %v549 = vmax.f32 %v548, %v398
        %v550 = vsub.f32 %v547, %v549
        %v551 = vmax.f32 %v550, 0.0
        %v552 = vmul.f32 %v545, %v551
        %s553 = smul.f32 %s529, %s531
        %v554 = vstv %s553
        %v555 = vadd.f32 %v554, %v400
        %v556 = vsub.f32 %v555, %v552
        %v557 = vrcp.pop %v556
        %v558 = vmul.f32 %v552, %v557
        %p559 = scmp.gt.f32.partialorder %s533, 0.0
        %s560 = scalar_select %p559, 1, 0
        %v561 = vstv %s560
        %vm562 = vcmp.eq.s32.totalorder %v561, 1
        %v563 = vsel %vm562, %v558, 0.0
        %v564 = vmax.f32 %v523, %v563
        %s565 = sadd.s32 %s401, 24
        %s566 = sld [smem:[#allocation10 + %s565]]
        %s567 = sadd.s32 %s401, 25
        %s568 = sld [smem:[#allocation10 + %s567]]
        %s569 = sadd.s32 %s401, 26
        %s570 = sld [smem:[#allocation10 + %s569]]
        %s571 = sadd.s32 %s401, 27
        %s572 = sld [smem:[#allocation10 + %s571]]
        %s573 = sadd.s32 %s401, 28
        %s574 = sld [smem:[#allocation10 + %s573]]
        %s575 = smul.f32 %s570, 0.5
        %s576 = ssub.f32 %s566, %s575
        %s577 = sadd.f32 %s566, %s575
        %s578 = smul.f32 %s572, 0.5
        %s579 = ssub.f32 %s568, %s578
        %s580 = sadd.f32 %s568, %s578
        %v581 = vstv %s577
        %v582 = vmin.f32 %v581, %v396
        %v583 = vstv %s576
        %v584 = vmax.f32 %v583, %v395
        %v585 = vsub.f32 %v582, %v584
        %v586 = vmax.f32 %v585, 0.0
        %v587 = vstv %s580
        %v588 = vmin.f32 %v587, %v399
        %v589 = vstv %s579
        %v590 = vmax.f32 %v589, %v398
        %v591 = vsub.f32 %v588, %v590
        %v592 = vmax.f32 %v591, 0.0
        %v593 = vmul.f32 %v586, %v592
        %s594 = smul.f32 %s570, %s572
        %v595 = vstv %s594
        %v596 = vadd.f32 %v595, %v400
        %v597 = vsub.f32 %v596, %v593
        %v598 = vrcp.pop %v597
        %v599 = vmul.f32 %v593, %v598
        %p600 = scmp.gt.f32.partialorder %s574, 0.0
        %s601 = scalar_select %p600, 1, 0
        %v602 = vstv %s601
        %vm603 = vcmp.eq.s32.totalorder %v602, 1
        %v604 = vsel %vm603, %v599, 0.0
        %v605 = vmax.f32 %v564, %v604
        %s606 = sadd.s32 %s401, 30
        %s607 = sld [smem:[#allocation10 + %s606]]
        %s608 = sadd.s32 %s401, 31
        %s609 = sld [smem:[#allocation10 + %s608]]
        %s610 = sadd.s32 %s401, 32
        %s611 = sld [smem:[#allocation10 + %s610]]
        %s612 = sadd.s32 %s401, 33
        %s613 = sld [smem:[#allocation10 + %s612]]
        %s614 = sadd.s32 %s401, 34
        %s615 = sld [smem:[#allocation10 + %s614]]
        %s616 = smul.f32 %s611, 0.5
        %s617 = ssub.f32 %s607, %s616
        %s618 = sadd.f32 %s607, %s616
        %s619 = smul.f32 %s613, 0.5
        %s620 = ssub.f32 %s609, %s619
        %s621 = sadd.f32 %s609, %s619
        %v622 = vstv %s618
        %v623 = vmin.f32 %v622, %v396
        %v624 = vstv %s617
        %v625 = vmax.f32 %v624, %v395
        %v626 = vsub.f32 %v623, %v625
        %v627 = vmax.f32 %v626, 0.0
        %v628 = vstv %s621
        %v629 = vmin.f32 %v628, %v399
        %v630 = vstv %s620
        %v631 = vmax.f32 %v630, %v398
        %v632 = vsub.f32 %v629, %v631
        %v633 = vmax.f32 %v632, 0.0
        %v634 = vmul.f32 %v627, %v633
        %s635 = smul.f32 %s611, %s613
        %v636 = vstv %s635
        %v637 = vadd.f32 %v636, %v400
        %v638 = vsub.f32 %v637, %v634
        %v639 = vrcp.pop %v638
        %v640 = vmul.f32 %v634, %v639
        %p641 = scmp.gt.f32.partialorder %s615, 0.0
        %s642 = scalar_select %p641, 1, 0
        %v643 = vstv %s642
        %vm644 = vcmp.eq.s32.totalorder %v643, 1
        %v645 = vsel %vm644, %v640, 0.0
        %v646 = vmax.f32 %v605, %v645
        %s647 = sadd.s32 %s401, 36
        %s648 = sld [smem:[#allocation10 + %s647]]
        %s649 = sadd.s32 %s401, 37
        %s650 = sld [smem:[#allocation10 + %s649]]
        %s651 = sadd.s32 %s401, 38
        %s652 = sld [smem:[#allocation10 + %s651]]
        %s653 = sadd.s32 %s401, 39
        %s654 = sld [smem:[#allocation10 + %s653]]
        %s655 = sadd.s32 %s401, 40
        %s656 = sld [smem:[#allocation10 + %s655]]
        %s657 = smul.f32 %s652, 0.5
        %s658 = ssub.f32 %s648, %s657
        %s659 = sadd.f32 %s648, %s657
        %s660 = smul.f32 %s654, 0.5
        %s661 = ssub.f32 %s650, %s660
        %s662 = sadd.f32 %s650, %s660
        %v663 = vstv %s659
        %v664 = vmin.f32 %v663, %v396
        %v665 = vstv %s658
        %v666 = vmax.f32 %v665, %v395
        %v667 = vsub.f32 %v664, %v666
        %v668 = vmax.f32 %v667, 0.0
        %v669 = vstv %s662
        %v670 = vmin.f32 %v669, %v399
        %v671 = vstv %s661
        %v672 = vmax.f32 %v671, %v398
        %v673 = vsub.f32 %v670, %v672
        %v674 = vmax.f32 %v673, 0.0
        %v675 = vmul.f32 %v668, %v674
        %s676 = smul.f32 %s652, %s654
        %v677 = vstv %s676
        %v678 = vadd.f32 %v677, %v400
        %v679 = vsub.f32 %v678, %v675
        %v680 = vrcp.pop %v679
        %v681 = vmul.f32 %v675, %v680
        %p682 = scmp.gt.f32.partialorder %s656, 0.0
        %s683 = scalar_select %p682, 1, 0
        %v684 = vstv %s683
        %vm685 = vcmp.eq.s32.totalorder %v684, 1
        %v686 = vsel %vm685, %v681, 0.0
        %v687 = vmax.f32 %v646, %v686
        %s688 = sadd.s32 %s401, 42
        %s689 = sld [smem:[#allocation10 + %s688]]
        %s690 = sadd.s32 %s401, 43
        %s691 = sld [smem:[#allocation10 + %s690]]
        %s692 = sadd.s32 %s401, 44
        %s693 = sld [smem:[#allocation10 + %s692]]
        %s694 = sadd.s32 %s401, 45
        %s695 = sld [smem:[#allocation10 + %s694]]
        %s696 = sadd.s32 %s401, 46
        %s697 = sld [smem:[#allocation10 + %s696]]
        %s698 = smul.f32 %s693, 0.5
        %s699 = ssub.f32 %s689, %s698
        %s700 = sadd.f32 %s689, %s698
        %s701 = smul.f32 %s695, 0.5
        %s702 = ssub.f32 %s691, %s701
        %s703 = sadd.f32 %s691, %s701
        %v704 = vstv %s700
        %v705 = vmin.f32 %v704, %v396
        %v706 = vstv %s699
        %v707 = vmax.f32 %v706, %v395
        %v708 = vsub.f32 %v705, %v707
        %v709 = vmax.f32 %v708, 0.0
        %v710 = vstv %s703
        %v711 = vmin.f32 %v710, %v399
        %v712 = vstv %s702
        %v713 = vmax.f32 %v712, %v398
        %v714 = vsub.f32 %v711, %v713
        %v715 = vmax.f32 %v714, 0.0
        %v716 = vmul.f32 %v709, %v715
        %s717 = smul.f32 %s693, %s695
        %v718 = vstv %s717
        %v719 = vadd.f32 %v718, %v400
        %v720 = vsub.f32 %v719, %v716
        %v721 = vrcp.pop %v720
        %v722 = vmul.f32 %v716, %v721
        %p723 = scmp.gt.f32.partialorder %s697, 0.0
        %s724 = scalar_select %p723, 1, 0
        %v725 = vstv %s724
        %vm726 = vcmp.eq.s32.totalorder %v725, 1
        %v727 = vsel %vm726, %v722, 0.0
        %v728 = vmax.f32 %v687, %v727
        %vm729 = vcmp.gt.f32.partialorder %v728, 0.5
        %v730 = vld [vmem:[%s278] sm:$0xff]
        %v731 = vsel %vm729, 0.0, %v730
        %s732 = scalar_lea.vmem %s269, 32 [#allocation7]
        %v733 = vld [vmem:[%s732] sm:$0xff]
        %v734 = vmax.f32 %v343, -16.118095
        %v735 = vmin.f32 %v734, 16.118095
        %v736 = vmax.f32 %v735, 0.0
        %v737 = vmul.f32 %v735, %v733
        %v738 = vsub.f32 %v736, %v737
        %v739 = vand.u32 2147483647, %v735
        %v740 = vsub.f32 0.0, %v739
        %v741 = vmul.f32 %v740, 1.442695
        %v742 = vpow.pop %v741
        %v743 = vadd.f32 %v742, 1.0
        %v744 = vlog2.pop %v743
        %v745 = vmul.f32 %v744, 0.6931472
        %v746 = vadd.f32 %v738, %v745
        %v747 = vmax.f32 %v731, %v733
        %vm748 = vcmp.gt.f32.partialorder %v747, 0.5
        %v749 = vsel %vm748, %v746, 0.0
        %750 = vadd.xlane.f32.xlu0 %v749
        %v751 = vpop.xlane.xlu0 %750
        %v752 = vrot.slane %v751, 4
        %v753 = vadd.f32 %v751, %v752
        %v754 = vrot.slane %v753, 2
        %v755 = vadd.f32 %v753, %v754
        %v756 = vrot.slane %v755, 1
        %v757 = vadd.f32 %v755, %v756
        %s758 = vtos %v757
        %759 = vadd.xlane.f32.xlu0 %v747
        %v760 = vpop.xlane.xlu0 %759
        %v761 = vrot.slane %v760, 4
        %v762 = vadd.f32 %v760, %v761
        %v763 = vrot.slane %v762, 2
        %v764 = vadd.f32 %v762, %v763
        %v765 = vrot.slane %v764, 1
        %v766 = vadd.f32 %v764, %v765
        %s767 = vtos %v766
        %s768 = sld [smem:[#allocation2 + $0x3]]
        %s769 = sadd.f32 %s768, %s758
        %s770 = scalar_lea.smem [#allocation2], 3
        %771 = sst [smem:[%s770]] %s769
        %s772 = sld [smem:[#allocation2 + $0x4]]
        %s773 = sadd.f32 %s772, %s767
        %s774 = scalar_lea.smem [#allocation2], 4
        %775 = sst [smem:[%s774]] %s773
        %776 = vadd.xlane.f32.xlu0 %v733
        %v777 = vpop.xlane.xlu0 %776
        %v778 = vrot.slane %v777, 4
        %v779 = vadd.f32 %v777, %v778
        %v780 = vrot.slane %v779, 2
        %v781 = vadd.f32 %v779, %v780
        %v782 = vrot.slane %v781, 1
        %v783 = vadd.f32 %v781, %v782
        %s784 = vtos %v783
        %p785 = scmp.gt.f32.partialorder %s784, 0.0
        // Predicated region
        $region57: #{tpu_custom_call.1} parent=35 // pred_check
          %p786 = pneg %p785
        $region58: #{tpu_custom_call.1} parent=35 // pred_check_branch
          %788 = sbr.rel (%p786) target = $region60
        $region59: #{tpu_custom_call.1} parent=35 // pred_region
          %v789 = vld [vmem:[%s269] sm:$0xff]
          %s790 = scalar_lea.vmem %s269, 8 [#allocation7]
          %v791 = vld [vmem:[%s790] sm:$0xff]
          %s792 = scalar_lea.vmem %s269, 16 [#allocation7]
          %v793 = vld [vmem:[%s792] sm:$0xff]
          %s794 = scalar_lea.vmem %s269, 24 [#allocation7]
          %v795 = vld [vmem:[%s794] sm:$0xff]
          %v796 = vmul.f32 %v793, 0.5
          %v797 = vsub.f32 %v789, %v796
          %v798 = vadd.f32 %v789, %v796
          %v799 = vmul.f32 %v795, 0.5
          %v800 = vsub.f32 %v791, %v799
          %v801 = vadd.f32 %v791, %v799
          %v802 = vmin.f32 %v396, %v798
          %v803 = vmax.f32 %v395, %v797
          %v804 = vsub.f32 %v802, %v803
          %v805 = vmax.f32 %v804, 0.0
          %v806 = vmin.f32 %v399, %v801
          %v807 = vmax.f32 %v398, %v800
          %v808 = vsub.f32 %v806, %v807
          %v809 = vmax.f32 %v808, 0.0
          %v810 = vmul.f32 %v805, %v809
          %v811 = vmul.f32 %v793, %v795
          %v812 = vadd.f32 %v400, %v811
          %v813 = vsub.f32 %v812, %v810
          %v814 = vrcp.pop %v813
          %v815 = vmul.f32 %v810, %v814
          %v816 = vmax.f32 %v396, %v798
          %v817 = vmin.f32 %v395, %v797
          %v818 = vsub.f32 %v816, %v817
          %v819 = vmax.f32 %v818, 0.0
          %v820 = vmax.f32 %v399, %v801
          %v821 = vmin.f32 %v398, %v800
          %v822 = vsub.f32 %v820, %v821
          %v823 = vmax.f32 %v822, 0.0
          %v824 = vmul.f32 %v819, %v823
          %v825 = vsub.f32 %v824, %v813
          %v826 = vrcp.pop %v824
          %v827 = vmul.f32 %v825, %v826
          %v828 = vsub.f32 %v815, %v827
          %vm829 = vcmp.gt.f32.partialorder %v733, 0.5
          %v830 = vsub.f32 1.0, %v828
          %v831 = vsel %vm829, %v830, 0.0
          %832 = vadd.xlane.f32.xlu0 %v831
          %v833 = vpop.xlane.xlu0 %832
          %v834 = vrot.slane %v833, 4
          %v835 = vadd.f32 %v833, %v834
          %v836 = vrot.slane %v835, 2
          %v837 = vadd.f32 %v835, %v836
          %v838 = vrot.slane %v837, 1
          %v839 = vadd.f32 %v837, %v838
          %s840 = vtos %v839
          %s841 = scalar_lea.vmem %s260, 40 [#allocation3]
          %v842 = vld [vmem:[%s841] sm:$0xff]
          %v843 = vld [vmem:[%s841 + $0x8] sm:$0xff]
          %v844 = vld [vmem:[%s841 + $0x10] sm:$0xff]
          %v845 = vld [vmem:[%s841 + $0x18] sm:$0xff]
          %s846 = scalar_lea.vmem %s269, 40 [#allocation7]
          %v847 = vld [vmem:[%s846] sm:$0xff]
          %v848 = vld [vmem:[%s846 + $0x8] sm:$0xff]
          %v849 = vld [vmem:[%s846 + $0x10] sm:$0xff]
          %v850 = vld [vmem:[%s846 + $0x18] sm:$0xff]
          %v851 = vmax.f32 %v842, 1e-07
          %v852 = vmax.f32 %v843, 1e-07
          %v853 = vmax.f32 %v844, 1e-07
          %v854 = vmax.f32 %v845, 1e-07
          %v855 = vmin.f32 %v851, 0.9999999
          %v856 = vmin.f32 %v852, 0.9999999
          %v857 = vmin.f32 %v853, 0.9999999
          %v858 = vmin.f32 %v854, 0.9999999
          %v859 = vsub.f32 0.0, %v847
          %v860 = vsub.f32 0.0, %v848
          %v861 = vsub.f32 0.0, %v849
          %v862 = vsub.f32 0.0, %v850
          %v863 = vlog2.pop %v855
          %v864 = vmul.f32 %v863, 0.6931472
          %v865 = vlog2.pop %v856
          %v866 = vmul.f32 %v865, 0.6931472
          %v867 = vlog2.pop %v857
          %v868 = vmul.f32 %v867, 0.6931472
          %v869 = vlog2.pop %v858
          %v870 = vmul.f32 %v869, 0.6931472
          %v871 = vmul.f32 %v859, %v864
          %v872 = vmul.f32 %v860, %v866
          %v873 = vmul.f32 %v861, %v868
          %v874 = vmul.f32 %v862, %v870
          %v875 = vsub.f32 1.0, %v847
          %v876 = vsub.f32 1.0, %v848
          %v877 = vsub.f32 1.0, %v849
          %v878 = vsub.f32 1.0, %v850
          %v879 = vsub.f32 1.0, %v855
          %v880 = vsub.f32 1.0, %v856
          %v881 = vsub.f32 1.0, %v857
          %v882 = vsub.f32 1.0, %v858
          %v883 = vlog2.pop %v879
          %v884 = vmul.f32 %v883, 0.6931472
          %v885 = vlog2.pop %v880
          %v886 = vmul.f32 %v885, 0.6931472
          %v887 = vlog2.pop %v881
          %v888 = vmul.f32 %v887, 0.6931472
          %v889 = vlog2.pop %v882
          %v890 = vmul.f32 %v889, 0.6931472
          %v891 = vmul.f32 %v875, %v884
          %v892 = vmul.f32 %v876, %v886
          %v893 = vmul.f32 %v877, %v888
          %v894 = vmul.f32 %v878, %v890
          %v895 = vsub.f32 %v871, %v891
          %v896 = vsub.f32 %v872, %v892
          %v897 = vsub.f32 %v873, %v893
          %v898 = vsub.f32 %v874, %v894
          %v899 = vadd.f32 %v895, %v896
          %v900 = vadd.f32 %v899, %v897
          %v901 = vadd.f32 %v900, %v898
          %v902 = vsel %vm829, %v901, 0.0
          %903 = vadd.xlane.f32.xlu0 %v902
          %v904 = vpop.xlane.xlu0 %903
          %v905 = vrot.slane %v904, 4
          %v906 = vadd.f32 %v904, %v905
          %v907 = vrot.slane %v906, 2
          %v908 = vadd.f32 %v906, %v907
          %v909 = vrot.slane %v908, 1
          %v910 = vadd.f32 %v908, %v909
          %s911 = vtos %v910
          %s912 = sld [smem:[#allocation2]]
          %s913 = sadd.f32 %s912, %s840
          %s914 = scalar_lea.smem [#allocation2], 0
          %915 = sst [smem:[%s914]] %s913
          %s916 = sld [smem:[#allocation2 + $0x1]]
          %s917 = sadd.f32 %s916, %s784
          %s918 = scalar_lea.smem [#allocation2], 1
          %919 = sst [smem:[%s918]] %s917
          %s920 = sld [smem:[#allocation2 + $0x2]]
          %s921 = sadd.f32 %s920, %s911
          %s922 = scalar_lea.smem [#allocation2], 2
          %923 = sst [smem:[%s922]] %s921
        $region60: #{tpu_custom_call.1} parent=35 // pred_fallthru
          _
        %p924 = scmp.eq.s32.totalorder %s27, 1
        %p925 = pnand %p924, %p314
        %p926 = pneg %p925
        // Predicated region
        $region61: #{tpu_custom_call.1} parent=35 // pred_check
          _
        $region62: #{tpu_custom_call.1} parent=35 // pred_check_branch
          %928 = sbr.rel (%p925) target = $region64
        $region63: #{tpu_custom_call.1} parent=35 // pred_region
          %s929 = sld [smem:[#allocation2]]
          %s930 = scalar_lea.smem [#allocation11], 0
          %931 = sst [smem:[%s930]] %s929
          %s932 = sld [smem:[#allocation2 + $0x1]]
          %s933 = scalar_lea.smem [#allocation11], 1
          %934 = sst [smem:[%s933]] %s932
          %s935 = sld [smem:[#allocation2 + $0x2]]
          %s936 = scalar_lea.smem [#allocation11], 2
          %937 = sst [smem:[%s936]] %s935
          %s938 = sld [smem:[#allocation2 + $0x3]]
          %s939 = scalar_lea.smem [#allocation11], 3
          %940 = sst [smem:[%s939]] %s938
          %s941 = sld [smem:[#allocation2 + $0x4]]
          %s942 = scalar_lea.smem [#allocation11], 4
          %943 = sst [smem:[%s942]] %s941
          %s944 = sld [smem:[#allocation2 + $0x5]]
          %s945 = scalar_lea.smem [#allocation11], 5
          %946 = sst [smem:[%s945]] %s944
          %s947 = sld [smem:[#allocation2 + $0x6]]
          %s948 = scalar_lea.smem [#allocation11], 6
          %949 = sst [smem:[%s948]] %s947
          %s950 = sld [smem:[#allocation2 + $0x7]]
          %s951 = scalar_lea.smem [#allocation11], 7
          %952 = sst [smem:[%s951]] %s950
        $region64: #{tpu_custom_call.1} parent=35 // pred_fallthru
          _
        // Predicated region
        $region65: #{tpu_custom_call.1} parent=35 // pred_check
          %p953 = pneg %p153
        $region66: #{tpu_custom_call.1} parent=35 // pred_check_branch
          %955 = sbr.rel (%p953) target = $region68
        $region67: #{tpu_custom_call.1} parent=35 // pred_region
          %s957 = ssub.s32 16, 16
          %958 = vsyncadd [#allocation5], %s957
          %961 = dma.smem_to_hbm [#allocation11], 16, %s4, [#allocation5]
        $region68: #{tpu_custom_call.1} parent=35 // pred_fallthru
          _
        // Predicated region
        $region69: #{tpu_custom_call.1} parent=35 // pred_check
          %p962 = pneg %p153
        $region70: #{tpu_custom_call.1} parent=35 // pred_check_branch
          %964 = sbr.rel (%p962) target = $region72
        $region71: #{tpu_custom_call.1} parent=35 // pred_region
          %965 = dma.done [#allocation5], 16
        $region72: #{tpu_custom_call.1} parent=35 // pred_fallthru
          _
        %966 = sfence
      $region36: #{tpu_custom_call.1} parent=5 // pred_fallthru
        _
      %p967 = scmp.le.s32.totalorder 2, %s18
      // Predicated region
      $region73: #{tpu_custom_call.1} parent=5 // pred_check
        %p968 = pneg %p967
      $region74: #{tpu_custom_call.1} parent=5 // pred_check_branch
        %970 = sbr.rel (%p968) target = $region76
      $region75: #{tpu_custom_call.1} parent=5 // pred_region
        %s971 = ssub.s32 %s18, 2
      $region76: #{tpu_custom_call.1} parent=5 // pred_fallthru
        _
    $region6: #{tpu_custom_call.1} parent=1 // loop_footer
      %s22 = sadd.s32 1, %s18
    $region7: #{tpu_custom_call.1} parent=1 // loop_footer_branch
      %17 = sbr.rel target = $region3
    $region8: #{tpu_custom_call.1} parent=1 // loop_exit
      _
    %972 = vsyncpa [#allocation4], 1
    %s973 = scalar_lea.sflag [#allocation4], 1
    %974 = vsyncpa %s973, 1
    %975 = vsyncpa [#allocation8], 1
    %s976 = scalar_lea.sflag [#allocation8], 1
    %977 = vsyncpa %s976, 1
    %978 = vsyncpa [#allocation5], 1
    %s979 = scalar_lea.sflag [#allocation5], 1
    %980 = vsyncpa %s979, 1
    %981 = vsyncpa [#allocation6], 1
    %s982 = scalar_lea.sflag [#allocation6], 1
    %983 = vsyncpa %s982, 1

</llo_original>
